<compile_context>
chip_gen: v5e
topology: v5e:2x2
jax: 0.10.0
libtpu: 0.0.40
codegen_flags: <defaults>
</compile_context>

<pallas_src>
import functools

import jax
import jax.numpy as jnp
from jax.experimental import pallas as pl
from jax.experimental.pallas import tpu as pltpu

_MIB = 1024 * 1024


def _const_block_spec(block_shape, index_map):
    """BlockSpec for a block whose index_map is constant across the whole grid.

    Single-buffer it (pl.Buffered(1)) so no second VMEM copy / redundant DMA buffer is
    allocated; gracefully fall back if this JAX build lacks the pipeline_mode kwarg.
    """
    try:
        return pl.BlockSpec(block_shape, index_map, pipeline_mode=pl.Buffered(1))
    except (AttributeError, TypeError):
        return pl.BlockSpec(block_shape, index_map)


def _choose_tn(N, itemsize, max_tn=None):
    """N-tile width: full N if it fits, else a large multiple of 128 (lane width)."""
    if max_tn is None:
        max_tn = 4096 if itemsize <= 2 else 2048
    if N <= max_tn:
        return N
    return max(128, (max_tn // 128) * 128)


def _vmem_limit(footprint_bytes):
    # Real footprint + ~25% headroom; cap well under v7x's 64 MiB per-TC VMEM.
    return int(min(max(int(footprint_bytes * 1.25), 32 * _MIB), 40 * _MIB))


# ---------------------------------------------------------------------------
# Fused classifier head kernel: Conv1d(1024->256)+BN (rank-1 split) + Conv1d(256->nc).
# ---------------------------------------------------------------------------
def _fused_head_kernel(x_ref, w1_ref, s1_ref, w2_ref, s2_ref, o_ref, h_ref):
    # x_ref:  (C_enc, tn)   encoder features, N on lanes
    # w1_ref: (C_mid, C_enc) layer-1 weights (BN scale folded, encoder half only)
    # s1_ref: (C_mid, 1) f32 per-batch shift = W1_glob_eff @ pooled + folded bias/BN shift
    # w2_ref: (C_out, C_mid) layer-2 weights
    # s2_ref: (C_out, 1) f32 layer-2 bias
    # o_ref:  (C_out, tn)    logits tile (NCL, lane-dense)
    # h_ref:  (C_mid, tn)    VMEM scratch for the layer-1 intermediate (never hits HBM)
    h = jnp.dot(w1_ref[...], x_ref[...], preferred_element_type=jnp.float32)
    h_ref[...] = (h + s1_ref[...]).astype(h_ref.dtype)
    y = jnp.dot(w2_ref[...], h_ref[...], preferred_element_type=jnp.float32)
    o_ref[...] = (y + s2_ref[...]).astype(o_ref.dtype)


def pvit_seg_head(x_encoder, feat, params, compute_dtype=jnp.bfloat16,
                  max_tn=None, eps=1e-5):
    """PViT_seg forward tail.  x_encoder: [B, 256, N] (NCL); feat: [B, T, 768].

    Returns [B, N, num_classes].  Eval-mode semantics (BN folded, Dropout identity).
    """
    B, C_enc, N = x_encoder.shape
    E = feat.shape[-1]
    w1 = params["w1"].reshape(params["w1"].shape[0], C_enc + E).astype(jnp.float32)
    C_mid = w1.shape[0]
    w2 = params["w2"].reshape(params["w2"].shape[0], C_mid).astype(jnp.float32)
    C_out = w2.shape[0]
    bn = params["bn1"]

    # Fold conv1 bias + eval-mode BatchNorm into weights / a per-channel shift (f32):
    #   bn(W x + b) = (scale*W) x + (scale*(b - mean) + beta)
    scale = bn["gamma"] * jax.lax.rsqrt(bn["var"] + eps)
    w1_eff = w1 * scale[:, None]
    shift1 = (params["b1"] - bn["mean"]) * scale + bn["beta"]            # [C_mid]

    # Token pooling + rank-1 split of the broadcast global feature:
    #   W1 @ cat([x_enc, g]) == W1[:, :256] @ x_enc + W1[:, 256:] @ pooled   (per batch)
    feat32 = feat.astype(jnp.float32)
    pooled = jnp.max(feat32, axis=1) + jnp.mean(feat32, axis=1)          # [B, E]
    w1_enc, w1_glob = w1_eff[:, :C_enc], w1_eff[:, C_enc:]
    shift1_b = (pooled @ w1_glob.T + shift1[None, :])                    # [B, C_mid]
    shift1_b = shift1_b.reshape(B, C_mid, 1).astype(jnp.float32)
    shift2 = params["b2"].astype(jnp.float32).reshape(C_out, 1)

    cdt = compute_dtype or x_encoder.dtype
    out_dtype = x_encoder.dtype
    x_c = x_encoder.astype(cdt)
    w1_c = w1_enc.astype(cdt)
    w2_c = w2.astype(cdt)

    itemsize = jnp.dtype(cdt).itemsize
    out_itemsize = jnp.dtype(out_dtype).itemsize
    tn = _choose_tn(N, itemsize, max_tn)
    grid = (B, pl.cdiv(N, tn))

    footprint = (2 * C_enc * tn * itemsize         # x tiles (double-buffered)
                 + 2 * C_out * tn * out_itemsize   # out tiles (double-buffered)
                 + 2 * C_mid * 4                   # per-batch shift (double-buffered)
                 + C_mid * C_enc * itemsize        # resident w1 (single-buffered)
                 + C_out * C_mid * itemsize        # resident w2 (single-buffered)
                 + C_out * 4                       # resident shift2
                 + C_mid * tn * itemsize)          # h scratch

    y = pl.pallas_call(
        _fused_head_kernel,
        out_shape=jax.ShapeDtypeStruct((B, C_out, N), out_dtype),
        grid_spec=pltpu.PrefetchScalarGridSpec(
            num_scalar_prefetch=0,
            grid=grid,
            in_specs=[
                pl.BlockSpec((None, C_enc, tn), lambda b, n: (b, 0, n)),
                _const_block_spec((C_mid, C_enc), lambda b, n: (0, 0)),
                pl.BlockSpec((None, C_mid, 1), lambda b, n: (b, 0, 0)),
                _const_block_spec((C_out, C_mid), lambda b, n: (0, 0)),
                _const_block_spec((C_out, 1), lambda b, n: (0, 0)),
            ],
            out_specs=pl.BlockSpec((None, C_out, tn), lambda b, n: (b, 0, n)),
            scratch_shapes=[pltpu.VMEM((C_mid, tn), cdt)],
        ),
        compiler_params=pltpu.CompilerParams(
            dimension_semantics=("parallel", "parallel"),
            vmem_limit_bytes=_vmem_limit(footprint)),
    )(x_c, w1_c, shift1_b, w2_c, shift2)

    # Final (0,2,1) permute stays in XLA: an in-kernel NLC output would put nc (<128)
    # on the lane axis and force masked partial stores; [B, N, nc] is tiny post-fusion.
    return jnp.transpose(y, (0, 2, 1))


# ---------------------------------------------------------------------------
# Generic fused pointwise Conv1d (+ folded eval-BN) (+ ReLU) kernel, NCL layout
# (ConvBNReLU1D building block used throughout pointMLP).
# ---------------------------------------------------------------------------
def _pointwise_conv_kernel(x_ref, w_ref, shift_ref, o_ref, *, relu):
    y = jnp.dot(w_ref[...], x_ref[...], preferred_element_type=jnp.float32)
    y = y + shift_ref[...]
    if relu:
        y = jnp.maximum(y, 0.0)
    o_ref[...] = y.astype(o_ref.dtype)


def pointwise_conv1d(x, weight, bias, bn=None, relu=False, eps=1e-5,
                     max_tn=None, compute_dtype=None, out_dtype=None):
    """Fused Conv1d(kernel_size=1) [+ eval-mode BatchNorm1d] [+ ReLU].

    x: [B, C_in, N] (NCL). weight: [C_out, C_in, 1] (or [C_out, C_in]).
    Pass compute_dtype=jnp.bfloat16 to halve HBM read traffic (f32 accumulation kept).
    """
    B, C_in, N = x.shape
    w = weight.reshape(weight.shape[0], C_in).astype(jnp.float32)
    C_out = w.shape[0]

    if bn is not None:
        scale = bn["gamma"] * jax.lax.rsqrt(bn["var"] + eps)             # (C_out,)
        w_eff = w * scale[:, None]
        shift = (bias - bn["mean"]) * scale + bn["beta"]
    else:
        w_eff = w
        shift = bias

    out_dtype = out_dtype or x.dtype
    cdt = compute_dtype or x.dtype
    x_c = x.astype(cdt)
    w_c = w_eff.astype(cdt)
    shift2 = shift.astype(jnp.float32).reshape(C_out, 1)

    itemsize = jnp.dtype(cdt).itemsize
    out_itemsize = jnp.dtype(out_dtype).itemsize
    tn = _choose_tn(N, itemsize, max_tn)
    grid = (B, pl.cdiv(N, tn))

    footprint = (2 * C_in * tn * itemsize
                 + 2 * C_out * tn * out_itemsize
                 + C_out * C_in * itemsize
                 + C_out * 4)

    kernel = functools.partial(_pointwise_conv_kernel, relu=relu)

    return pl.pallas_call(
        kernel,
        out_shape=jax.ShapeDtypeStruct((B, C_out, N), out_dtype),
        grid_spec=pltpu.PrefetchScalarGridSpec(
            num_scalar_prefetch=0,
            grid=grid,
            in_specs=[
                pl.BlockSpec((None, C_in, tn), lambda b, n: (b, 0, n)),
                _const_block_spec((C_out, C_in), lambda b, n: (0, 0)),
                _const_block_spec((C_out, 1), lambda b, n: (0, 0)),
            ],
            out_specs=pl.BlockSpec((None, C_out, tn), lambda b, n: (b, 0, n)),
        ),
        compiler_params=pltpu.CompilerParams(
            dimension_semantics=("parallel", "parallel"),
            vmem_limit_bytes=_vmem_limit(footprint)),
    )(x_c, w_c, shift2)


def conv_bn_relu_1d(x, weight, bias, bn, eps=1e-5, **kw):
    return pointwise_conv1d(x, weight, bias, bn=bn, relu=True, eps=eps, **kw)


# ---------------------------------------------------------------------------
# Pure-JAX references (mirror the PyTorch forward tail exactly).
# ---------------------------------------------------------------------------
def _ref_pointwise(x, weight, bias, bn=None, relu=False, eps=1e-5):
    w = weight.reshape(weight.shape[0], weight.shape[1])
    y = jnp.einsum("oc,bcn->bon", w, x) + bias[None, :, None]
    if bn is not None:
        y = (y - bn["mean"][None, :, None]) * jax.lax.rsqrt(bn["var"] + eps)[None, :, None]
        y = y * bn["gamma"][None, :, None] + bn["beta"][None, :, None]
    if relu:
        y = jnp.maximum(y, 0.0)
    return y


def _reference_head(x_encoder, feat, params):
    B, _, N = x_encoder.shape
    pooled = jnp.max(feat, axis=1, keepdims=True) + jnp.mean(feat, axis=1, keepdims=True)
    g = jnp.broadcast_to(jnp.transpose(pooled, (0, 2, 1)), (B, feat.shape[-1], N))
    cat = jnp.concatenate([x_encoder, g], axis=1)
    y = _ref_pointwise(cat, params["w1"], params["b1"], bn=params["bn1"])
    y = _ref_pointwise(y, params["w2"], params["b2"])
    return jnp.transpose(y, (0, 2, 1))


if __name__ == "__main__":
    # Small but module-consistent shapes: npoint=196, classifier sees 256+768 channels.
    B, N, T = 2, 196, 8
    C_enc, C_feat = 256, 768
    C_mid, num_classes = 256, 40

    key = jax.random.PRNGKey(0)
    keys = jax.random.split(key, 12)

    # Synthetic stand-ins for the (undefined) encoder / transformer outputs.
    x_encoder = jax.random.normal(keys[0], (B, C_enc, N), dtype=jnp.float32)
    feat = jax.random.normal(keys[1], (B, T, C_feat), dtype=jnp.float32)

    C_in1 = C_enc + C_feat
    b1w = 1.0 / jnp.sqrt(jnp.float32(C_in1))
    w1 = jax.random.uniform(keys[2], (C_mid, C_in1, 1), minval=-b1w, maxval=b1w)
    b1 = jax.random.uniform(keys[3], (C_mid,), minval=-b1w, maxval=b1w)
    bn1 = dict(
        gamma=jax.random.uniform(keys[4], (C_mid,), minval=0.5, maxval=1.5),
        beta=0.1 * jax.random.normal(keys[5], (C_mid,)),
        mean=0.1 * jax.random.normal(keys[6], (C_mid,)),
        var=jax.random.uniform(keys[7], (C_mid,), minval=0.5, maxval=1.5),
    )
    b2w = 1.0 / jnp.sqrt(jnp.float32(C_mid))
    w2 = jax.random.uniform(keys[8], (num_classes, C_mid, 1), minval=-b2w, maxval=b2w)
    b2 = jax.random.uniform(keys[9], (num_classes,), minval=-b2w, maxval=b2w)
    params = dict(w1=w1, b1=b1, bn1=bn1, w2=w2, b2=b2)

    ref = _reference_head(x_encoder, feat, params)

    # f32 path — tight tolerance against the unfused reference.
    out_f32 = jax.block_until_ready(
        pvit_seg_head(x_encoder, feat, params, compute_dtype=jnp.float32))
    assert out_f32.shape == (B, N, num_classes), out_f32.shape
    assert jnp.allclose(out_f32, ref, atol=1e-3, rtol=1e-3), \
        float(jnp.max(jnp.abs(out_f32 - ref)))

    # Multi-tile path (forced tn=128, ragged last tile) — still exact.
    out_tiled = jax.block_until_ready(
        pvit_seg_head(x_encoder, feat, params, compute_dtype=jnp.float32, max_tn=128))
    assert jnp.allclose(out_tiled, ref, atol=1e-3, rtol=1e-3), \
        float(jnp.max(jnp.abs(out_tiled - ref)))

    # Default bf16 compute path (f32 accumulation) — looser tolerance from input rounding.
    out_bf16 = jax.block_until_ready(pvit_seg_head(x_encoder, feat, params))
    assert out_bf16.shape == (B, N, num_classes), out_bf16.shape
    assert jnp.allclose(out_bf16, ref, atol=5e-2, rtol=5e-2), \
        float(jnp.max(jnp.abs(out_bf16 - ref)))

    # Also exercise the ReLU path (ConvBNReLU1D building block of pointMLP).
    xr = jax.random.normal(keys[10], (B, 64, N), dtype=jnp.float32)
    bw = 1.0 / jnp.sqrt(jnp.float32(64))
    wr = jax.random.uniform(keys[11], (128, 64, 1), minval=-bw, maxval=bw)
    br = jnp.zeros((128,), jnp.float32)
    bnr = dict(gamma=jnp.ones((128,)), beta=jnp.zeros((128,)),
               mean=jnp.zeros((128,)), var=jnp.ones((128,)))
    outr = jax.block_until_ready(conv_bn_relu_1d(xr, wr, br, bnr))
    refr = _ref_pointwise(xr, wr, br, bn=bnr, relu=True)
    assert jnp.allclose(outr, refr, atol=1e-3, rtol=1e-3)

    print("KERNEL_OK")
</pallas_src>

<mosaic_0001>
module attributes {stable_mosaic.version = 11 : i64} {
  func.func @_fused_head_kernel(%arg0: i32, %arg1: i32, %arg2: memref<1x256x196xf32, #tpu.memory_space<vmem>>, %arg3: memref<256x256xf32, #tpu.memory_space<vmem>>, %arg4: memref<1x256x1xf32, #tpu.memory_space<vmem>>, %arg5: memref<40x256xf32, #tpu.memory_space<vmem>>, %arg6: memref<40x1xf32, #tpu.memory_space<vmem>>, %arg7: memref<1x40x196xf32, #tpu.memory_space<vmem>>, %arg8: memref<256x196xf32, #tpu.memory_space<vmem>>) attributes {dimension_semantics = [#tpu.dimension_semantics<parallel>, #tpu.dimension_semantics<parallel>], iteration_bounds = array<i64: 2, 1>, scalar_prefetch = 0 : i64, scratch_operands = 1 : i64, tpu.core_type = #tpu.core_type<tc>, window_params = [{transform_indices = @transform_0, window_bounds = array<i64: 1, 256, 196>}, {pipeline_mode = #tpu.pipeline_mode<synchronous>, transform_indices = @transform_1, window_bounds = array<i64: 256, 256>}, {transform_indices = @transform_2, window_bounds = array<i64: 1, 256, 1>}, {pipeline_mode = #tpu.pipeline_mode<synchronous>, transform_indices = @transform_3, window_bounds = array<i64: 40, 256>}, {pipeline_mode = #tpu.pipeline_mode<synchronous>, transform_indices = @transform_4, window_bounds = array<i64: 40, 1>}, {transform_indices = @transform_5, window_bounds = array<i64: 1, 40, 196>}]} {
    %c0 = arith.constant 0 : index
    %c0_0 = arith.constant 0 : index
    %0 = vector.load %arg3[%c0, %c0_0] : memref<256x256xf32, #tpu.memory_space<vmem>>, vector<256x256xf32>
    %c0_1 = arith.constant 0 : index
    %c0_2 = arith.constant 0 : index
    %c0_3 = arith.constant 0 : index
    %1 = vector.load %arg2[%c0_1, %c0_2, %c0_3] : memref<1x256x196xf32, #tpu.memory_space<vmem>>, vector<1x256x196xf32>
    %2 = vector.shape_cast %1 : vector<1x256x196xf32> to vector<256x196xf32>
    %cst = arith.constant dense<0.000000e+00> : vector<256x196xf32>
    %3 = tpu.matmul %0, %2, %cst {dimension_numbers = #tpu.dot_dimension_numbers<[1], [0], [0], [1], [0, 0, 1, 1], [], []>} : vector<256x256xf32>, vector<256x196xf32>, vector<256x196xf32> -> vector<256x196xf32>
    %c0_4 = arith.constant 0 : index
    %c0_5 = arith.constant 0 : index
    %c0_6 = arith.constant 0 : index
    %4 = vector.load %arg4[%c0_4, %c0_5, %c0_6] : memref<1x256x1xf32, #tpu.memory_space<vmem>>, vector<1x256x1xf32>
    %5 = vector.shape_cast %4 : vector<1x256x1xf32> to vector<256x1xf32>
    %6 = vector.broadcast %5 : vector<256x1xf32> to vector<256x196xf32>
    %7 = arith.addf %3, %6 : vector<256x196xf32>
    %c0_7 = arith.constant 0 : index
    %c0_8 = arith.constant 0 : index
    %8 = vector.load %arg8[%c0_7, %c0_8] : memref<256x196xf32, #tpu.memory_space<vmem>>, vector<256x196xf32>
    tpu.vector_store %arg8[%c0_7, %c0_8], %7 {strides = array<i32>} : memref<256x196xf32, #tpu.memory_space<vmem>>, vector<256x196xf32>,
    %c0_9 = arith.constant 0 : index
    %c0_10 = arith.constant 0 : index
    %9 = vector.load %arg5[%c0_9, %c0_10] : memref<40x256xf32, #tpu.memory_space<vmem>>, vector<40x256xf32>
    %c0_11 = arith.constant 0 : index
    %c0_12 = arith.constant 0 : index
    %10 = vector.load %arg8[%c0_11, %c0_12] : memref<256x196xf32, #tpu.memory_space<vmem>>, vector<256x196xf32>
    %cst_13 = arith.constant dense<0.000000e+00> : vector<40x196xf32>
    %11 = tpu.matmul %9, %10, %cst_13 {dimension_numbers = #tpu.dot_dimension_numbers<[1], [0], [0], [1], [0, 0, 1, 1], [], []>} : vector<40x256xf32>, vector<256x196xf32>, vector<40x196xf32> -> vector<40x196xf32>
    %c0_14 = arith.constant 0 : index
    %c0_15 = arith.constant 0 : index
    %12 = vector.load %arg6[%c0_14, %c0_15] : memref<40x1xf32, #tpu.memory_space<vmem>>, vector<40x1xf32>
    %13 = vector.broadcast %12 : vector<40x1xf32> to vector<40x196xf32>
    %14 = arith.addf %11, %13 : vector<40x196xf32>
    %c0_16 = arith.constant 0 : index
    %c0_17 = arith.constant 0 : index
    %c0_18 = arith.constant 0 : index
    %15 = vector.load %arg7[%c0_16, %c0_17, %c0_18] : memref<1x40x196xf32, #tpu.memory_space<vmem>>, vector<1x40x196xf32>
    %16 = vector.shape_cast %15 : vector<1x40x196xf32> to vector<40x196xf32>
    %17 = vector.shape_cast %14 : vector<40x196xf32> to vector<1x40x196xf32>
    tpu.vector_store %arg7[%c0_16, %c0_17, %c0_18], %17 {strides = array<i32>} : memref<1x40x196xf32, #tpu.memory_space<vmem>>, vector<1x40x196xf32>,
    return
  }
  func.func @transform_0(%arg0: i32, %arg1: i32) -> (i32, i32, i32) {
    %c0_i32 = arith.constant 0 : i32
    %c0_i32_0 = arith.constant 0 : i32
    return %arg0, %c0_i32, %arg1 : i32, i32, i32
  }
  func.func @transform_1(%arg0: i32, %arg1: i32) -> (i32, i32) {
    %c0_i32 = arith.constant 0 : i32
    %c0_i32_0 = arith.constant 0 : i32
    %c0_i32_1 = arith.constant 0 : i32
    return %c0_i32, %c0_i32_0 : i32, i32
  }
  func.func @transform_2(%arg0: i32, %arg1: i32) -> (i32, i32, i32) {
    %c0_i32 = arith.constant 0 : i32
    %c0_i32_0 = arith.constant 0 : i32
    %c0_i32_1 = arith.constant 0 : i32
    return %arg0, %c0_i32, %c0_i32_0 : i32, i32, i32
  }
  func.func @transform_3(%arg0: i32, %arg1: i32) -> (i32, i32) {
    %c0_i32 = arith.constant 0 : i32
    %c0_i32_0 = arith.constant 0 : i32
    %c0_i32_1 = arith.constant 0 : i32
    return %c0_i32, %c0_i32_0 : i32, i32
  }
  func.func @transform_4(%arg0: i32, %arg1: i32) -> (i32, i32) {
    %c0_i32 = arith.constant 0 : i32
    %c0_i32_0 = arith.constant 0 : i32
    %c0_i32_1 = arith.constant 0 : i32
    return %c0_i32, %c0_i32_0 : i32, i32
  }
  func.func @transform_5(%arg0: i32, %arg1: i32) -> (i32, i32, i32) {
    %c0_i32 = arith.constant 0 : i32
    %c0_i32_0 = arith.constant 0 : i32
    return %arg0, %c0_i32, %arg1 : i32, i32, i32
  }
}

</mosaic_0001>

<llo_original>
// kernel: tpu_custom_call.1
$region0: #{tpu_custom_call.1}
  #allocation0 [shape = 'u32[]', space=smem, size = 0x4, offset = 0x4, fixed_abs, tag = 'smem constant byte address 0x4 - core index']
  #allocation1 [shape = 'u32[72,128]{1,0:T(1,128)}', space=vmem, size = 0x9000, scoped, tag = 'internal scratch']
  #allocation2 [shape = 'f32[256,196]{1,0:T(8,128)}', space=vmem, size = 0x40000, scoped, tag = 'scratch operand']
  %s0 = inlined_call_operand.vmem [shape: f32[2,256,196], index: 0, kind: input, shape index: {}]
  %s1 = inlined_call_operand.vmem [shape: f32[256,256], index: 1, kind: input, shape index: {}]
  %s2 = inlined_call_operand.vmem [shape: f32[2,256,1], index: 2, kind: input, shape index: {}]
  %s3 = inlined_call_operand.vmem [shape: f32[40,256], index: 3, kind: input, shape index: {}]
  %s4 = inlined_call_operand.vmem [shape: f32[40,1], index: 4, kind: input, shape index: {}]
  %s5 = inlined_call_operand.hbm [shape: f32[2,40,196], index: 5, kind: output, shape index: {}]
  %s6 = sld [smem:[#allocation0]]
  $region53: #{tpu_custom_call.1} parent=0
    _
  %s8 = ssub.s32 1, %s6
  %s9 = scalar_select 0, %s8, %s6
  $region1: #{tpu_custom_call.1} parent=0
    #allocation3 [shape = 'u8[81920]{0}', space=vmem, size = 0x14000, scoped, tag = 'output window, operand 0']
    #allocation4 [shape = 's32[2]{0}', space=sflag, size = 0x8, scoped, tag = 'scoped memory for tpu_custom_call.1']
    %10 = vsyncpa [#allocation4], 0
    %s11 = scalar_lea.sflag [#allocation4], 1
    %12 = vsyncpa %s11, 0
    loop: start=0, step=1, limit=4
    $region2: #{tpu_custom_call.1} parent=1 // loop_pre_header
      _
    $region3: #{tpu_custom_call.1} parent=1 // loop_header
      %s14 = sphi 0, %s18
      %p15 = scmp.ge.s32.totalorder %s14, 4
      %s21 = sphi 0, %s33
      %s22 = sphi 0, %s29
      %s23 = sphi 0, %s21
      %s24 = sphi 0, %s22
      %s25 = sphi 0, %s23
      %s26 = sphi 0, %s24
      %s38 = sphi 0, %s40
      %s41 = sphi 0, %s38
      %s42 = sphi 0, %s41
      %s58 = sphi 0, %s42
      %s62 = sphi 0, %s62
      %s64 = sphi 0, %s62
      %s65 = sphi 0, %s64
      %s79 = sphi 0, %s65
      %s85 = sphi 0, %s87
      %s88 = sphi 0, %s85
      %s89 = sphi 0, %s88
      %s105 = sphi 0, %s89
      %s109 = sphi 0, %s109
      %s111 = sphi 0, %s109
      %s112 = sphi 0, %s111
      %s126 = sphi 0, %s112
      %s130 = sphi 0, %s130
      %s132 = sphi 0, %s130
      %s133 = sphi 0, %s132
      %s147 = sphi 0, %s133
      %s155 = sphi 0, %s157
      %s158 = sphi 0, %s155
      %s159 = sphi 0, %s158
      %s175 = sphi 0, %s159
    $region4: #{tpu_custom_call.1} parent=1 // loop_header_branch
      %17 = sbr.rel (%p15) target = $region8
    $region5: #{tpu_custom_call.1} parent=1 // loop_body
      %s19 = ssub.s32 %s14, 1
      %s20 = ssub.s32 %s14, 2
      %s27 = sadd.s32 1, %s22
      %p28 = scmp.ge.s32.totalorder %s27, 1
      %s29 = scalar_select %p28, 0, %s27
      %s30 = sadd.s32 1, %s21
      %s31 = scalar_select %p28, %s30, %s21
      %p32 = scmp.ge.s32.totalorder %s31, 2
      %s33 = scalar_select %p32, 0, %s31
      %s34 = ssub.s32 %s21, %s33
      %s35 = ssub.s32 %s22, %s29
      %s36 = sor.u32 %s34, %s35
      %p37 = scmp.eq.s32.totalorder %s36, 0
      %s39 = sadd.s32 %s38, 1
      %s40 = scalar_select %p37, %s38, %s39
      %p43 = pneg %p37
      %p44 = scmp.eq.s32.totalorder %s14, 1
      %p45 = por %p43, %p44
      %p46 = scmp.ne.s32.totalorder %s38, %s41
      %p47 = scmp.eq.s32.totalorder %s14, 0
      %p48 = por %p46, %p47
      %p49 = scmp.ne.s32.totalorder %s38, %s41
      %p50 = scmp.eq.s32.totalorder %s19, 1
      %p51 = por %p49, %p50
      %p52 = scmp.ne.s32.totalorder %s41, %s42
      %p53 = scmp.eq.s32.totalorder %s19, 0
      %p54 = por %p52, %p53
      %p55 = scmp.ne.s32.totalorder %s41, %s42
      %p56 = scmp.eq.s32.totalorder %s20, 1
      %p57 = por %p55, %p56
      %p59 = scmp.ne.s32.totalorder %s42, %s58
      %p60 = scmp.eq.s32.totalorder %s20, 0
      %p61 = por %p59, %p60
      %s63 = sadd.s32 %s62, 1
      %p66 = scmp.eq.s32.totalorder %s14, 1
      %p67 = scmp.ne.s32.totalorder %s62, %s64
      %p68 = scmp.eq.s32.totalorder %s14, 0
      %p69 = por %p67, %p68
      %p70 = scmp.ne.s32.totalorder %s62, %s64
      %p71 = scmp.eq.s32.totalorder %s19, 1
      %p72 = por %p70, %p71
      %p73 = scmp.ne.s32.totalorder %s64, %s65
      %p74 = scmp.eq.s32.totalorder %s19, 0
      %p75 = por %p73, %p74
      %p76 = scmp.ne.s32.totalorder %s64, %s65
      %p77 = scmp.eq.s32.totalorder %s20, 1
      %p78 = por %p76, %p77
      %p80 = scmp.ne.s32.totalorder %s65, %s79
      %p81 = scmp.eq.s32.totalorder %s20, 0
      %p82 = por %p80, %p81
      %s83 = ssub.s32 %s21, %s33
      %p84 = scmp.eq.s32.totalorder %s83, 0
      %s86 = sadd.s32 %s85, 1
      %s87 = scalar_select %p84, %s85, %s86
      %p90 = pneg %p84
      %p91 = scmp.eq.s32.totalorder %s14, 1
      %p92 = por %p90, %p91
      %p93 = scmp.ne.s32.totalorder %s85, %s88
      %p94 = scmp.eq.s32.totalorder %s14, 0
      %p95 = por %p93, %p94
      %p96 = scmp.ne.s32.totalorder %s85, %s88
      %p97 = scmp.eq.s32.totalorder %s19, 1
      %p98 = por %p96, %p97
      %p99 = scmp.ne.s32.totalorder %s88, %s89
      %p100 = scmp.eq.s32.totalorder %s19, 0
      %p101 = por %p99, %p100
      %p102 = scmp.ne.s32.totalorder %s88, %s89
      %p103 = scmp.eq.s32.totalorder %s20, 1
      %p104 = por %p102, %p103
      %p106 = scmp.ne.s32.totalorder %s89, %s105
      %p107 = scmp.eq.s32.totalorder %s20, 0
      %p108 = por %p106, %p107
      %s110 = sadd.s32 %s109, 1
      %p113 = scmp.eq.s32.totalorder %s14, 1
      %p114 = scmp.ne.s32.totalorder %s109, %s111
      %p115 = scmp.eq.s32.totalorder %s14, 0
      %p116 = por %p114, %p115
      %p117 = scmp.ne.s32.totalorder %s109, %s111
      %p118 = scmp.eq.s32.totalorder %s19, 1
      %p119 = por %p117, %p118
      %p120 = scmp.ne.s32.totalorder %s111, %s112
      %p121 = scmp.eq.s32.totalorder %s19, 0
      %p122 = por %p120, %p121
      %p123 = scmp.ne.s32.totalorder %s111, %s112
      %p124 = scmp.eq.s32.totalorder %s20, 1
      %p125 = por %p123, %p124
      %p127 = scmp.ne.s32.totalorder %s112, %s126
      %p128 = scmp.eq.s32.totalorder %s20, 0
      %p129 = por %p127, %p128
      %s131 = sadd.s32 %s130, 1
      %p134 = scmp.eq.s32.totalorder %s14, 1
      %p135 = scmp.ne.s32.totalorder %s130, %s132
      %p136 = scmp.eq.s32.totalorder %s14, 0
      %p137 = por %p135, %p136
      %p138 = scmp.ne.s32.totalorder %s130, %s132
      %p139 = scmp.eq.s32.totalorder %s19, 1
      %p140 = por %p138, %p139
      %p141 = scmp.ne.s32.totalorder %s132, %s133
      %p142 = scmp.eq.s32.totalorder %s19, 0
      %p143 = por %p141, %p142
      %p144 = scmp.ne.s32.totalorder %s132, %s133
      %p145 = scmp.eq.s32.totalorder %s20, 1
      %p146 = por %p144, %p145
      %p148 = scmp.ne.s32.totalorder %s133, %s147
      %p149 = scmp.eq.s32.totalorder %s20, 0
      %p150 = por %p148, %p149
      %s151 = ssub.s32 %s21, %s33
      %s152 = ssub.s32 %s22, %s29
      %s153 = sor.u32 %s151, %s152
      %p154 = scmp.eq.s32.totalorder %s153, 0
      %s156 = sadd.s32 %s155, 1
      %s157 = scalar_select %p154, %s155, %s156
      %p160 = pneg %p154
      %p161 = scmp.eq.s32.totalorder %s14, 1
      %p162 = por %p160, %p161
      %p163 = scmp.ne.s32.totalorder %s155, %s158
      %p164 = scmp.eq.s32.totalorder %s14, 0
      %p165 = por %p163, %p164
      %p166 = scmp.ne.s32.totalorder %s155, %s158
      %p167 = scmp.eq.s32.totalorder %s19, 1
      %p168 = por %p166, %p167
      %p169 = scmp.ne.s32.totalorder %s158, %s159
      %p170 = scmp.eq.s32.totalorder %s19, 0
      %p171 = por %p169, %p170
      %p172 = scmp.ne.s32.totalorder %s158, %s159
      %p173 = scmp.eq.s32.totalorder %s20, 1
      %p174 = por %p172, %p173
      %p176 = scmp.ne.s32.totalorder %s159, %s175
      %p177 = scmp.eq.s32.totalorder %s20, 0
      %p178 = por %p176, %p177
      %p179 = scmp.le.s32.totalorder 1, %s14
      %p180 = scmp.lt.s32.totalorder %s14, 3
      %p181 = pnand %p179, %p180
      %p182 = pneg %p181
      // Predicated region
      $region9: #{tpu_custom_call.1} parent=5 // pred_check
        _
      $region10: #{tpu_custom_call.1} parent=5 // pred_check_branch
        %184 = sbr.rel (%p181) target = $region12
      $region11: #{tpu_custom_call.1} parent=5 // pred_region
        %s185 = ssub.s32 %s14, 1
        // Predicated region
        $region13: #{tpu_custom_call.1} parent=11 // pred_check
          %p186 = pneg %p75
        $region14: #{tpu_custom_call.1} parent=11 // pred_check_branch
          %188 = sbr.rel (%p186) target = $region16
        $region15: #{tpu_custom_call.1} parent=11 // pred_region
          _
        $region16: #{tpu_custom_call.1} parent=11 // pred_fallthru
          _
        // Predicated region
        $region17: #{tpu_custom_call.1} parent=11 // pred_check
          %p189 = pneg %p122
        $region18: #{tpu_custom_call.1} parent=11 // pred_check_branch
          %191 = sbr.rel (%p189) target = $region20
        $region19: #{tpu_custom_call.1} parent=11 // pred_region
          _
        $region20: #{tpu_custom_call.1} parent=11 // pred_fallthru
          _
        // Predicated region
        $region21: #{tpu_custom_call.1} parent=11 // pred_check
          %p192 = pneg %p143
        $region22: #{tpu_custom_call.1} parent=11 // pred_check_branch
          %194 = sbr.rel (%p192) target = $region24
        $region23: #{tpu_custom_call.1} parent=11 // pred_region
          _
        $region24: #{tpu_custom_call.1} parent=11 // pred_fallthru
          _
      $region12: #{tpu_custom_call.1} parent=5 // pred_fallthru
        _
      %p195 = scmp.lt.s32.totalorder %s14, 2
      // Predicated region
      $region25: #{tpu_custom_call.1} parent=5 // pred_check
        %p196 = pneg %p195
      $region26: #{tpu_custom_call.1} parent=5 // pred_check_branch
        %198 = sbr.rel (%p196) target = $region28
      $region27: #{tpu_custom_call.1} parent=5 // pred_region
        // Predicated region
        $region29: #{tpu_custom_call.1} parent=27 // pred_check
          %p199 = pneg %p48
        $region30: #{tpu_custom_call.1} parent=27 // pred_check_branch
          %201 = sbr.rel (%p199) target = $region32
        $region31: #{tpu_custom_call.1} parent=27 // pred_region
          %s202 = smul.u32 2, %s22
          %p203 = scmp.lt.s32.totalorder %s21, 1
          %s204 = scalar_select %p203, %s21, 1
          %p205 = scmp.lt.s32.totalorder %s202, 1
          %s206 = scalar_select %p205, %s202, 1
          %s207 = smul.addr %s204, 64
          %s208 = sadd.s32 %s206, %s207
          %s209 = smul.addr %s208, 8
          %s210 = scalar_lea.vmem %s0, %s209
          %s211 = smul.u32 2, %s22
        $region32: #{tpu_custom_call.1} parent=27 // pred_fallthru
          _
        // Predicated region
        $region33: #{tpu_custom_call.1} parent=27 // pred_check
          %p212 = pneg %p95
        $region34: #{tpu_custom_call.1} parent=27 // pred_check_branch
          %214 = sbr.rel (%p212) target = $region36
        $region35: #{tpu_custom_call.1} parent=27 // pred_region
          %p215 = scmp.lt.s32.totalorder %s21, 1
          %s216 = scalar_select %p215, %s21, 1
          %s217 = smul.addr %s216, 32
          %s218 = smul.addr %s217, 8
          %s219 = scalar_lea.vmem %s2, %s218
        $region36: #{tpu_custom_call.1} parent=27 // pred_fallthru
          _
      $region28: #{tpu_custom_call.1} parent=5 // pred_fallthru
        _
      %p220 = scmp.le.s32.totalorder 1, %s14
      %p221 = scmp.lt.s32.totalorder %s14, 3
      %p222 = pnand %p220, %p221
      %p223 = pneg %p222
      // Predicated region
      $region37: #{tpu_custom_call.1} parent=5 // pred_check
        _
      $region38: #{tpu_custom_call.1} parent=5 // pred_check_branch
        %225 = sbr.rel (%p222) target = $region40
      $region39: #{tpu_custom_call.1} parent=5 // pred_region
        %s226 = ssub.s32 %s14, 1
        %s227 = smul.u32 2, %s24
        %p228 = scmp.lt.s32.totalorder %s23, 1
        %s229 = scalar_select %p228, %s23, 1
        %p230 = scmp.lt.s32.totalorder %s227, 1
        %s231 = scalar_select %p230, %s227, 1
        %s232 = smul.addr %s229, 64
        %s233 = sadd.s32 %s231, %s232
        %s234 = smul.addr %s233, 8
        %s235 = scalar_lea.vmem %s0, %s234
        %p236 = pneg %p54
        %p237 = pneg %p51
        %p238 = pneg %p75
        %p239 = pneg %p72
        %p240 = scmp.lt.s32.totalorder %s23, 1
        %s241 = scalar_select %p240, %s23, 1
        %s242 = smul.addr %s241, 32
        %s243 = smul.addr %s242, 8
        %s244 = scalar_lea.vmem %s2, %s243
        %p245 = pneg %p101
        %p246 = pneg %p98
        %p247 = pneg %p122
        %p248 = pneg %p119
        %p249 = pneg %p143
        %p250 = pneg %p140
        %p251 = pneg %p171
        %p252 = pneg %p168
        %s253 = sand.u32 %s158, 1
        %s254 = scalar_lea.sflag [#allocation4], %s253
        %s255 = sand.u32 %s158, 1
        %s256 = smul.addr %s255, 80
        %s257 = scalar_lea.vmem [#allocation3], %s256
        %s258 = smul.u32 2, %s24
        %p259 = scmp.lt.s32.totalorder %s23, 1
        %s260 = scalar_select %p259, %s23, 1
        %p261 = scmp.lt.s32.totalorder %s258, 1
        %s262 = scalar_select %p261, %s258, 1
        %s263 = smul.addr %s260, 64
        %s264 = sadd.s32 %s262, %s263
        %s265 = smul.addr %s264, 8
        %s266 = scalar_lea.vmem %s0, %s265
        %s267 = smul.u32 2, %s24
        %p268 = scmp.lt.s32.totalorder %s23, 1
        %s269 = scalar_select %p268, %s23, 1
        %s270 = smul.addr %s269, 32
        %s271 = smul.addr %s270, 8
        %s272 = scalar_lea.vmem %s2, %s271
        %s273 = smul.u32 2, %s24
        %v274 = vld [vmem:[%s1] sm:$0xff]
        %v275 = vld [vmem:[%s1 + $0x8] sm:$0xff]
        %v276 = vld [vmem:[%s1 + $0x10] sm:$0xff]
        %v277 = vld [vmem:[%s1 + $0x18] sm:$0xff]
        %v278 = vld [vmem:[%s1 + $0x20] sm:$0xff]
        %v279 = vld [vmem:[%s1 + $0x28] sm:$0xff]
        %v280 = vld [vmem:[%s1 + $0x30] sm:$0xff]
        %v281 = vld [vmem:[%s1 + $0x38] sm:$0xff]
        %v282 = vld [vmem:[%s1 + $0x40] sm:$0xff]
        %v283 = vld [vmem:[%s1 + $0x48] sm:$0xff]
        %v284 = vld [vmem:[%s1 + $0x50] sm:$0xff]
        %v285 = vld [vmem:[%s1 + $0x58] sm:$0xff]
        %v286 = vld [vmem:[%s1 + $0x60] sm:$0xff]
        %v287 = vld [vmem:[%s1 + $0x68] sm:$0xff]
        %v288 = vld [vmem:[%s1 + $0x70] sm:$0xff]
        %v289 = vld [vmem:[%s1 + $0x78] sm:$0xff]
        %v290 = vld [vmem:[%s1 + $0x80] sm:$0xff]
        %v291 = vld [vmem:[%s1 + $0x88] sm:$0xff]
        %v292 = vld [vmem:[%s1 + $0x90] sm:$0xff]
        %v293 = vld [vmem:[%s1 + $0x98] sm:$0xff]
        %v294 = vld [vmem:[%s1 + $0xa0] sm:$0xff]
        %v295 = vld [vmem:[%s1 + $0xa8] sm:$0xff]
        %v296 = vld [vmem:[%s1 + $0xb0] sm:$0xff]
        %v297 = vld [vmem:[%s1 + $0xb8] sm:$0xff]
        %v298 = vld [vmem:[%s1 + $0xc0] sm:$0xff]
        %v299 = vld [vmem:[%s1 + $0xc8] sm:$0xff]
        %v300 = vld [vmem:[%s1 + $0xd0] sm:$0xff]
        %v301 = vld [vmem:[%s1 + $0xd8] sm:$0xff]
        %v302 = vld [vmem:[%s1 + $0xe0] sm:$0xff]
        %v303 = vld [vmem:[%s1 + $0xe8] sm:$0xff]
        %v304 = vld [vmem:[%s1 + $0xf0] sm:$0xff]
        %v305 = vld [vmem:[%s1 + $0xf8] sm:$0xff]
        %v306 = vld [vmem:[%s1 + $0x100] sm:$0xff]
        %v307 = vld [vmem:[%s1 + $0x108] sm:$0xff]
        %v308 = vld [vmem:[%s1 + $0x110] sm:$0xff]
        %v309 = vld [vmem:[%s1 + $0x118] sm:$0xff]
        %v310 = vld [vmem:[%s1 + $0x120] sm:$0xff]
        %v311 = vld [vmem:[%s1 + $0x128] sm:$0xff]
        %v312 = vld [vmem:[%s1 + $0x130] sm:$0xff]
        %v313 = vld [vmem:[%s1 + $0x138] sm:$0xff]
        %v314 = vld [vmem:[%s1 + $0x140] sm:$0xff]
        %v315 = vld [vmem:[%s1 + $0x148] sm:$0xff]
        %v316 = vld [vmem:[%s1 + $0x150] sm:$0xff]
        %v317 = vld [vmem:[%s1 + $0x158] sm:$0xff]
        %v318 = vld [vmem:[%s1 + $0x160] sm:$0xff]
        %v319 = vld [vmem:[%s1 + $0x168] sm:$0xff]
        %v320 = vld [vmem:[%s1 + $0x170] sm:$0xff]
        %v321 = vld [vmem:[%s1 + $0x178] sm:$0xff]
        %v322 = vld [vmem:[%s1 + $0x180] sm:$0xff]
        %v323 = vld [vmem:[%s1 + $0x188] sm:$0xff]
        %v324 = vld [vmem:[%s1 + $0x190] sm:$0xff]
        %v325 = vld [vmem:[%s1 + $0x198] sm:$0xff]
        %v326 = vld [vmem:[%s1 + $0x1a0] sm:$0xff]
        %v327 = vld [vmem:[%s1 + $0x1a8] sm:$0xff]
        %v328 = vld [vmem:[%s1 + $0x1b0] sm:$0xff]
        %v329 = vld [vmem:[%s1 + $0x1b8] sm:$0xff]
        %v330 = vld [vmem:[%s1 + $0x1c0] sm:$0xff]
        %v331 = vld [vmem:[%s1 + $0x1c8] sm:$0xff]
        %v332 = vld [vmem:[%s1 + $0x1d0] sm:$0xff]
        %v333 = vld [vmem:[%s1 + $0x1d8] sm:$0xff]
        %v334 = vld [vmem:[%s1 + $0x1e0] sm:$0xff]
        %v335 = vld [vmem:[%s1 + $0x1e8] sm:$0xff]
        %v336 = vld [vmem:[%s1 + $0x1f0] sm:$0xff]
        %v337 = vld [vmem:[%s1 + $0x1f8] sm:$0xff]
        %v338 = vld [vmem:[%s266] sm:$0xff]
        %v339 = vld [vmem:[%s266 + $0x8] sm:$0xff]
        %v340 = vld [vmem:[%s266 + $0x10] sm:$0xff]
        %v341 = vld [vmem:[%s266 + $0x18] sm:$0xff]
        %v342 = vld [vmem:[%s266 + $0x20] sm:$0xff]
        %v343 = vld [vmem:[%s266 + $0x28] sm:$0xff]
        %v344 = vld [vmem:[%s266 + $0x30] sm:$0xff]
        %v345 = vld [vmem:[%s266 + $0x38] sm:$0xff]
        %v346 = vld [vmem:[%s266 + $0x40] sm:$0xff]
        %v347 = vld [vmem:[%s266 + $0x48] sm:$0xff]
        %v348 = vld [vmem:[%s266 + $0x50] sm:$0xff]
        %v349 = vld [vmem:[%s266 + $0x58] sm:$0xff]
        %v350 = vld [vmem:[%s266 + $0x60] sm:$0xff]
        %v351 = vld [vmem:[%s266 + $0x68] sm:$0xff]
        %v352 = vld [vmem:[%s266 + $0x70] sm:$0xff]
        %v353 = vld [vmem:[%s266 + $0x78] sm:$0xff]
        %v354 = vld [vmem:[%s266 + $0x80] sm:$0xff]
        %v355 = vld [vmem:[%s266 + $0x88] sm:$0xff]
        %v356 = vld [vmem:[%s266 + $0x90] sm:$0xff]
        %v357 = vld [vmem:[%s266 + $0x98] sm:$0xff]
        %v358 = vld [vmem:[%s266 + $0xa0] sm:$0xff]
        %v359 = vld [vmem:[%s266 + $0xa8] sm:$0xff]
        %v360 = vld [vmem:[%s266 + $0xb0] sm:$0xff]
        %v361 = vld [vmem:[%s266 + $0xb8] sm:$0xff]
        %v362 = vld [vmem:[%s266 + $0xc0] sm:$0xff]
        %v363 = vld [vmem:[%s266 + $0xc8] sm:$0xff]
        %v364 = vld [vmem:[%s266 + $0xd0] sm:$0xff]
        %v365 = vld [vmem:[%s266 + $0xd8] sm:$0xff]
        %v366 = vld [vmem:[%s266 + $0xe0] sm:$0xff]
        %v367 = vld [vmem:[%s266 + $0xe8] sm:$0xff]
        %v368 = vld [vmem:[%s266 + $0xf0] sm:$0xff]
        %v369 = vld [vmem:[%s266 + $0xf8] sm:$0xff]
        %v370 = vld [vmem:[%s266 + $0x100] sm:$0xff]
        %v371 = vld [vmem:[%s266 + $0x108] sm:$0xff]
        %v372 = vld [vmem:[%s266 + $0x110] sm:$0xff]
        %v373 = vld [vmem:[%s266 + $0x118] sm:$0xff]
        %v374 = vld [vmem:[%s266 + $0x120] sm:$0xff]
        %v375 = vld [vmem:[%s266 + $0x128] sm:$0xff]
        %v376 = vld [vmem:[%s266 + $0x130] sm:$0xff]
        %v377 = vld [vmem:[%s266 + $0x138] sm:$0xff]
        %v378 = vld [vmem:[%s266 + $0x140] sm:$0xff]
        %v379 = vld [vmem:[%s266 + $0x148] sm:$0xff]
        %v380 = vld [vmem:[%s266 + $0x150] sm:$0xff]
        %v381 = vld [vmem:[%s266 + $0x158] sm:$0xff]
        %v382 = vld [vmem:[%s266 + $0x160] sm:$0xff]
        %v383 = vld [vmem:[%s266 + $0x168] sm:$0xff]
        %v384 = vld [vmem:[%s266 + $0x170] sm:$0xff]
        %v385 = vld [vmem:[%s266 + $0x178] sm:$0xff]
        %v386 = vld [vmem:[%s266 + $0x180] sm:$0xff]
        %v387 = vld [vmem:[%s266 + $0x188] sm:$0xff]
        %v388 = vld [vmem:[%s266 + $0x190] sm:$0xff]
        %v389 = vld [vmem:[%s266 + $0x198] sm:$0xff]
        %v390 = vld [vmem:[%s266 + $0x1a0] sm:$0xff]
        %v391 = vld [vmem:[%s266 + $0x1a8] sm:$0xff]
        %v392 = vld [vmem:[%s266 + $0x1b0] sm:$0xff]
        %v393 = vld [vmem:[%s266 + $0x1b8] sm:$0xff]
        %v394 = vld [vmem:[%s266 + $0x1c0] sm:$0xff]
        %v395 = vld [vmem:[%s266 + $0x1c8] sm:$0xff]
        %v396 = vld [vmem:[%s266 + $0x1d0] sm:$0xff]
        %v397 = vld [vmem:[%s266 + $0x1d8] sm:$0xff]
        %v398 = vld [vmem:[%s266 + $0x1e0] sm:$0xff]
        %v399 = vld [vmem:[%s266 + $0x1e8] sm:$0xff]
        %v400 = vld [vmem:[%s266 + $0x1f0] sm:$0xff]
        %v401 = vld [vmem:[%s266 + $0x1f8] sm:$0xff]
        %v402 = vld [vmem:[%s272] sm:$0xff]
        %v403 = vld [vmem:[%s272 + $0x8] sm:$0xff]
        %v404 = vld [vmem:[%s272 + $0x10] sm:$0xff]
        %v405 = vld [vmem:[%s272 + $0x18] sm:$0xff]
        %v406 = vld [vmem:[%s272 + $0x20] sm:$0xff]
        %v407 = vld [vmem:[%s272 + $0x28] sm:$0xff]
        %v408 = vld [vmem:[%s272 + $0x30] sm:$0xff]
        %v409 = vld [vmem:[%s272 + $0x38] sm:$0xff]
        %v410 = vld [vmem:[%s272 + $0x40] sm:$0xff]
        %v411 = vld [vmem:[%s272 + $0x48] sm:$0xff]
        %v412 = vld [vmem:[%s272 + $0x50] sm:$0xff]
        %v413 = vld [vmem:[%s272 + $0x58] sm:$0xff]
        %v414 = vld [vmem:[%s272 + $0x60] sm:$0xff]
        %v415 = vld [vmem:[%s272 + $0x68] sm:$0xff]
        %v416 = vld [vmem:[%s272 + $0x70] sm:$0xff]
        %v417 = vld [vmem:[%s272 + $0x78] sm:$0xff]
        %v418 = vld [vmem:[%s272 + $0x80] sm:$0xff]
        %v419 = vld [vmem:[%s272 + $0x88] sm:$0xff]
        %v420 = vld [vmem:[%s272 + $0x90] sm:$0xff]
        %v421 = vld [vmem:[%s272 + $0x98] sm:$0xff]
        %v422 = vld [vmem:[%s272 + $0xa0] sm:$0xff]
        %v423 = vld [vmem:[%s272 + $0xa8] sm:$0xff]
        %v424 = vld [vmem:[%s272 + $0xb0] sm:$0xff]
        %v425 = vld [vmem:[%s272 + $0xb8] sm:$0xff]
        %v426 = vld [vmem:[%s272 + $0xc0] sm:$0xff]
        %v427 = vld [vmem:[%s272 + $0xc8] sm:$0xff]
        %v428 = vld [vmem:[%s272 + $0xd0] sm:$0xff]
        %v429 = vld [vmem:[%s272 + $0xd8] sm:$0xff]
        %v430 = vld [vmem:[%s272 + $0xe0] sm:$0xff]
        %v431 = vld [vmem:[%s272 + $0xe8] sm:$0xff]
        %v432 = vld [vmem:[%s272 + $0xf0] sm:$0xff]
        %v433 = vld [vmem:[%s272 + $0xf8] sm:$0xff]
        %435 = vset.pattern.permute.xlu0 0
        %436 = vperm.xlu0 %435, %v402
        %v437 = vpop.permute.xlu0 %436
        %440 = vset.pattern.permute.xlu0 0
        %441 = vperm.xlu0 %440, %v403
        %v442 = vpop.permute.xlu0 %441
        %445 = vset.pattern.permute.xlu0 0
        %446 = vperm.xlu0 %445, %v404
        %v447 = vpop.permute.xlu0 %446
        %450 = vset.pattern.permute.xlu0 0
        %451 = vperm.xlu0 %450, %v405
        %v452 = vpop.permute.xlu0 %451
        %455 = vset.pattern.permute.xlu0 0
        %456 = vperm.xlu0 %455, %v406
        %v457 = vpop.permute.xlu0 %456
        %460 = vset.pattern.permute.xlu0 0
        %461 = vperm.xlu0 %460, %v407
        %v462 = vpop.permute.xlu0 %461
        %465 = vset.pattern.permute.xlu0 0
        %466 = vperm.xlu0 %465, %v408
        %v467 = vpop.permute.xlu0 %466
        %470 = vset.pattern.permute.xlu0 0
        %471 = vperm.xlu0 %470, %v409
        %v472 = vpop.permute.xlu0 %471
        %475 = vset.pattern.permute.xlu0 0
        %476 = vperm.xlu0 %475, %v410
        %v477 = vpop.permute.xlu0 %476
        %480 = vset.pattern.permute.xlu0 0
        %481 = vperm.xlu0 %480, %v411
        %v482 = vpop.permute.xlu0 %481
        %485 = vset.pattern.permute.xlu0 0
        %486 = vperm.xlu0 %485, %v412
        %v487 = vpop.permute.xlu0 %486
        %490 = vset.pattern.permute.xlu0 0
        %491 = vperm.xlu0 %490, %v413
        %v492 = vpop.permute.xlu0 %491
        %495 = vset.pattern.permute.xlu0 0
        %496 = vperm.xlu0 %495, %v414
        %v497 = vpop.permute.xlu0 %496
        %500 = vset.pattern.permute.xlu0 0
        %501 = vperm.xlu0 %500, %v415
        %v502 = vpop.permute.xlu0 %501
        %505 = vset.pattern.permute.xlu0 0
        %506 = vperm.xlu0 %505, %v416
        %v507 = vpop.permute.xlu0 %506
        %510 = vset.pattern.permute.xlu0 0
        %511 = vperm.xlu0 %510, %v417
        %v512 = vpop.permute.xlu0 %511
        %515 = vset.pattern.permute.xlu0 0
        %516 = vperm.xlu0 %515, %v418
        %v517 = vpop.permute.xlu0 %516
        %520 = vset.pattern.permute.xlu0 0
        %521 = vperm.xlu0 %520, %v419
        %v522 = vpop.permute.xlu0 %521
        %525 = vset.pattern.permute.xlu0 0
        %526 = vperm.xlu0 %525, %v420
        %v527 = vpop.permute.xlu0 %526
        %530 = vset.pattern.permute.xlu0 0
        %531 = vperm.xlu0 %530, %v421
        %v532 = vpop.permute.xlu0 %531
        %535 = vset.pattern.permute.xlu0 0
        %536 = vperm.xlu0 %535, %v422
        %v537 = vpop.permute.xlu0 %536
        %540 = vset.pattern.permute.xlu0 0
        %541 = vperm.xlu0 %540, %v423
        %v542 = vpop.permute.xlu0 %541
        %545 = vset.pattern.permute.xlu0 0
        %546 = vperm.xlu0 %545, %v424
        %v547 = vpop.permute.xlu0 %546
        %550 = vset.pattern.permute.xlu0 0
        %551 = vperm.xlu0 %550, %v425
        %v552 = vpop.permute.xlu0 %551
        %555 = vset.pattern.permute.xlu0 0
        %556 = vperm.xlu0 %555, %v426
        %v557 = vpop.permute.xlu0 %556
        %560 = vset.pattern.permute.xlu0 0
        %561 = vperm.xlu0 %560, %v427
        %v562 = vpop.permute.xlu0 %561
        %565 = vset.pattern.permute.xlu0 0
        %566 = vperm.xlu0 %565, %v428
        %v567 = vpop.permute.xlu0 %566
        %570 = vset.pattern.permute.xlu0 0
        %571 = vperm.xlu0 %570, %v429
        %v572 = vpop.permute.xlu0 %571
        %575 = vset.pattern.permute.xlu0 0
        %576 = vperm.xlu0 %575, %v430
        %v577 = vpop.permute.xlu0 %576
        %580 = vset.pattern.permute.xlu0 0
        %581 = vperm.xlu0 %580, %v431
        %v582 = vpop.permute.xlu0 %581
        %585 = vset.pattern.permute.xlu0 0
        %586 = vperm.xlu0 %585, %v432
        %v587 = vpop.permute.xlu0 %586
        %590 = vset.pattern.permute.xlu0 0
        %591 = vperm.xlu0 %590, %v433
        %v592 = vpop.permute.xlu0 %591
        %594 = vmatpush.msra.mxu0 %v368
        %595 = vmatpush.msra.mxu0 %v366
        %596 = vmatpush.msra.mxu0 %v364
        %597 = vmatpush.msra.mxu0 %v362
        %598 = vmatpush.msra.mxu0 %v360
        %599 = vmatpush.msra.mxu0 %v358
        %600 = vmatpush.msra.mxu0 %v356
        %601 = vmatpush.msra.mxu0 %v354
        %602 = vmatpush.msra.mxu0 %v352
        %603 = vmatpush.msra.mxu0 %v350
        %604 = vmatpush.msra.mxu0 %v348
        %605 = vmatpush.msra.mxu0 %v346
        %606 = vmatpush.msra.mxu0 %v344
        %607 = vmatpush.msra.mxu0 %v342
        %608 = vmatpush.msra.mxu0 %v340
        %609 = vmatpush.msra.mxu0 %v338
        %610 = vmatmul.f32.gmra.mxu0 %v274
        %v611 = vpop.f32.mrf.mxu0
        %v612 = vadd.f32 %v437, %v611
        %613 = vmatmul.f32.gmra.mxu0 %v276
        %v614 = vpop.f32.mrf.mxu0
        %v615 = vadd.f32 %v442, %v614
        %616 = vmatmul.f32.gmra.mxu0 %v278
        %v617 = vpop.f32.mrf.mxu0
        %v618 = vadd.f32 %v447, %v617
        %619 = vmatmul.f32.gmra.mxu0 %v280
        %v620 = vpop.f32.mrf.mxu0
        %v621 = vadd.f32 %v452, %v620
        %622 = vmatmul.f32.gmra.mxu0 %v282
        %v623 = vpop.f32.mrf.mxu0
        %v624 = vadd.f32 %v457, %v623
        %625 = vmatmul.f32.gmra.mxu0 %v284
        %v626 = vpop.f32.mrf.mxu0
        %v627 = vadd.f32 %v462, %v626
        %628 = vmatmul.f32.gmra.mxu0 %v286
        %v629 = vpop.f32.mrf.mxu0
        %v630 = vadd.f32 %v467, %v629
        %631 = vmatmul.f32.gmra.mxu0 %v288
        %v632 = vpop.f32.mrf.mxu0
        %v633 = vadd.f32 %v472, %v632
        %634 = vmatmul.f32.gmra.mxu0 %v290
        %v635 = vpop.f32.mrf.mxu0
        %v636 = vadd.f32 %v477, %v635
        %637 = vmatmul.f32.gmra.mxu0 %v292
        %v638 = vpop.f32.mrf.mxu0
        %v639 = vadd.f32 %v482, %v638
        %640 = vmatmul.f32.gmra.mxu0 %v294
        %v641 = vpop.f32.mrf.mxu0
        %v642 = vadd.f32 %v487, %v641
        %643 = vmatmul.f32.gmra.mxu0 %v296
        %v644 = vpop.f32.mrf.mxu0
        %v645 = vadd.f32 %v492, %v644
        %646 = vmatmul.f32.gmra.mxu0 %v298
        %v647 = vpop.f32.mrf.mxu0
        %v648 = vadd.f32 %v497, %v647
        %649 = vmatmul.f32.gmra.mxu0 %v300
        %v650 = vpop.f32.mrf.mxu0
        %v651 = vadd.f32 %v502, %v650
        %652 = vmatmul.f32.gmra.mxu0 %v302
        %v653 = vpop.f32.mrf.mxu0
        %v654 = vadd.f32 %v507, %v653
        %655 = vmatmul.f32.gmra.mxu0 %v304
        %v656 = vpop.f32.mrf.mxu0
        %v657 = vadd.f32 %v512, %v656
        %658 = vmatmul.f32.gmra.mxu0 %v306
        %v659 = vpop.f32.mrf.mxu0
        %v660 = vadd.f32 %v517, %v659
        %661 = vmatmul.f32.gmra.mxu0 %v308
        %v662 = vpop.f32.mrf.mxu0
        %v663 = vadd.f32 %v522, %v662
        %664 = vmatmul.f32.gmra.mxu0 %v310
        %v665 = vpop.f32.mrf.mxu0
        %v666 = vadd.f32 %v527, %v665
        %667 = vmatmul.f32.gmra.mxu0 %v312
        %v668 = vpop.f32.mrf.mxu0
        %v669 = vadd.f32 %v532, %v668
        %670 = vmatmul.f32.gmra.mxu0 %v314
        %v671 = vpop.f32.mrf.mxu0
        %v672 = vadd.f32 %v537, %v671
        %673 = vmatmul.f32.gmra.mxu0 %v316
        %v674 = vpop.f32.mrf.mxu0
        %v675 = vadd.f32 %v542, %v674
        %676 = vmatmul.f32.gmra.mxu0 %v318
        %v677 = vpop.f32.mrf.mxu0
        %v678 = vadd.f32 %v547, %v677
        %679 = vmatmul.f32.gmra.mxu0 %v320
        %v680 = vpop.f32.mrf.mxu0
        %v681 = vadd.f32 %v552, %v680
        %682 = vmatmul.f32.gmra.mxu0 %v322
        %v683 = vpop.f32.mrf.mxu0
        %v684 = vadd.f32 %v557, %v683
        %685 = vmatmul.f32.gmra.mxu0 %v324
        %v686 = vpop.f32.mrf.mxu0
        %v687 = vadd.f32 %v562, %v686
        %688 = vmatmul.f32.gmra.mxu0 %v326
        %v689 = vpop.f32.mrf.mxu0
        %v690 = vadd.f32 %v567, %v689
        %691 = vmatmul.f32.gmra.mxu0 %v328
        %v692 = vpop.f32.mrf.mxu0
        %v693 = vadd.f32 %v572, %v692
        %694 = vmatmul.f32.gmra.mxu0 %v330
        %v695 = vpop.f32.mrf.mxu0
        %v696 = vadd.f32 %v577, %v695
        %697 = vmatmul.f32.gmra.mxu0 %v332
        %v698 = vpop.f32.mrf.mxu0
        %v699 = vadd.f32 %v582, %v698
        %700 = vmatmul.f32.gmra.mxu0 %v334
        %v701 = vpop.f32.mrf.mxu0
        %v702 = vadd.f32 %v587, %v701
        %703 = vmatmul.f32.gmra.mxu0 %v336
        %v704 = vpop.f32.mrf.mxu0
        %v705 = vadd.f32 %v592, %v704
        %706 = vdwg.mxu0
        %707 = vmatpush.msra.mxu0 %v400
        %708 = vmatpush.msra.mxu0 %v398
        %709 = vmatpush.msra.mxu0 %v396
        %710 = vmatpush.msra.mxu0 %v394
        %711 = vmatpush.msra.mxu0 %v392
        %712 = vmatpush.msra.mxu0 %v390
        %713 = vmatpush.msra.mxu0 %v388
        %714 = vmatpush.msra.mxu0 %v386
        %715 = vmatpush.msra.mxu0 %v384
        %716 = vmatpush.msra.mxu0 %v382
        %717 = vmatpush.msra.mxu0 %v380
        %718 = vmatpush.msra.mxu0 %v378
        %719 = vmatpush.msra.mxu0 %v376
        %720 = vmatpush.msra.mxu0 %v374
        %721 = vmatpush.msra.mxu0 %v372
        %722 = vmatpush.msra.mxu0 %v370
        %723 = vmatmul.f32.gmra.mxu0 %v275
        %v724 = vpop.f32.mrf.mxu0
        %v725 = vadd.f32 %v612, %v724
        %726 = vmatmul.f32.gmra.mxu0 %v277
        %v727 = vpop.f32.mrf.mxu0
        %v728 = vadd.f32 %v615, %v727
        %729 = vmatmul.f32.gmra.mxu0 %v279
        %v730 = vpop.f32.mrf.mxu0
        %v731 = vadd.f32 %v618, %v730
        %732 = vmatmul.f32.gmra.mxu0 %v281
        %v733 = vpop.f32.mrf.mxu0
        %v734 = vadd.f32 %v621, %v733
        %735 = vmatmul.f32.gmra.mxu0 %v283
        %v736 = vpop.f32.mrf.mxu0
        %v737 = vadd.f32 %v624, %v736
        %738 = vmatmul.f32.gmra.mxu0 %v285
        %v739 = vpop.f32.mrf.mxu0
        %v740 = vadd.f32 %v627, %v739
        %741 = vmatmul.f32.gmra.mxu0 %v287
        %v742 = vpop.f32.mrf.mxu0
        %v743 = vadd.f32 %v630, %v742
        %744 = vmatmul.f32.gmra.mxu0 %v289
        %v745 = vpop.f32.mrf.mxu0
        %v746 = vadd.f32 %v633, %v745
        %747 = vmatmul.f32.gmra.mxu0 %v291
        %v748 = vpop.f32.mrf.mxu0
        %v749 = vadd.f32 %v636, %v748
        %750 = vmatmul.f32.gmra.mxu0 %v293
        %v751 = vpop.f32.mrf.mxu0
        %v752 = vadd.f32 %v639, %v751
        %753 = vmatmul.f32.gmra.mxu0 %v295
        %v754 = vpop.f32.mrf.mxu0
        %v755 = vadd.f32 %v642, %v754
        %756 = vmatmul.f32.gmra.mxu0 %v297
        %v757 = vpop.f32.mrf.mxu0
        %v758 = vadd.f32 %v645, %v757
        %759 = vmatmul.f32.gmra.mxu0 %v299
        %v760 = vpop.f32.mrf.mxu0
        %v761 = vadd.f32 %v648, %v760
        %762 = vmatmul.f32.gmra.mxu0 %v301
        %v763 = vpop.f32.mrf.mxu0
        %v764 = vadd.f32 %v651, %v763
        %765 = vmatmul.f32.gmra.mxu0 %v303
        %v766 = vpop.f32.mrf.mxu0
        %v767 = vadd.f32 %v654, %v766
        %768 = vmatmul.f32.gmra.mxu0 %v305
        %v769 = vpop.f32.mrf.mxu0
        %v770 = vadd.f32 %v657, %v769
        %771 = vmatmul.f32.gmra.mxu0 %v307
        %v772 = vpop.f32.mrf.mxu0
        %v773 = vadd.f32 %v660, %v772
        %774 = vmatmul.f32.gmra.mxu0 %v309
        %v775 = vpop.f32.mrf.mxu0
        %v776 = vadd.f32 %v663, %v775
        %777 = vmatmul.f32.gmra.mxu0 %v311
        %v778 = vpop.f32.mrf.mxu0
        %v779 = vadd.f32 %v666, %v778
        %780 = vmatmul.f32.gmra.mxu0 %v313
        %v781 = vpop.f32.mrf.mxu0
        %v782 = vadd.f32 %v669, %v781
        %783 = vmatmul.f32.gmra.mxu0 %v315
        %v784 = vpop.f32.mrf.mxu0
        %v785 = vadd.f32 %v672, %v784
        %786 = vmatmul.f32.gmra.mxu0 %v317
        %v787 = vpop.f32.mrf.mxu0
        %v788 = vadd.f32 %v675, %v787
        %789 = vmatmul.f32.gmra.mxu0 %v319
        %v790 = vpop.f32.mrf.mxu0
        %v791 = vadd.f32 %v678, %v790
        %792 = vmatmul.f32.gmra.mxu0 %v321
        %v793 = vpop.f32.mrf.mxu0
        %v794 = vadd.f32 %v681, %v793
        %795 = vmatmul.f32.gmra.mxu0 %v323
        %v796 = vpop.f32.mrf.mxu0
        %v797 = vadd.f32 %v684, %v796
        %798 = vmatmul.f32.gmra.mxu0 %v325
        %v799 = vpop.f32.mrf.mxu0
        %v800 = vadd.f32 %v687, %v799
        %801 = vmatmul.f32.gmra.mxu0 %v327
        %v802 = vpop.f32.mrf.mxu0
        %v803 = vadd.f32 %v690, %v802
        %804 = vmatmul.f32.gmra.mxu0 %v329
        %v805 = vpop.f32.mrf.mxu0
        %v806 = vadd.f32 %v693, %v805
        %807 = vmatmul.f32.gmra.mxu0 %v331
        %v808 = vpop.f32.mrf.mxu0
        %v809 = vadd.f32 %v696, %v808
        %810 = vmatmul.f32.gmra.mxu0 %v333
        %v811 = vpop.f32.mrf.mxu0
        %v812 = vadd.f32 %v699, %v811
        %813 = vmatmul.f32.gmra.mxu0 %v335
        %v814 = vpop.f32.mrf.mxu0
        %v815 = vadd.f32 %v702, %v814
        %816 = vmatmul.f32.gmra.mxu0 %v337
        %v817 = vpop.f32.mrf.mxu0
        %v818 = vadd.f32 %v705, %v817
        %819 = vdwg.mxu0
        %820 = vmatpush.msra.mxu0 %v369
        %821 = vmatpush.msra.mxu0 %v367
        %822 = vmatpush.msra.mxu0 %v365
        %823 = vmatpush.msra.mxu0 %v363
        %824 = vmatpush.msra.mxu0 %v361
        %825 = vmatpush.msra.mxu0 %v359
        %826 = vmatpush.msra.mxu0 %v357
        %827 = vmatpush.msra.mxu0 %v355
        %828 = vmatpush.msra.mxu0 %v353
        %829 = vmatpush.msra.mxu0 %v351
        %830 = vmatpush.msra.mxu0 %v349
        %831 = vmatpush.msra.mxu0 %v347
        %832 = vmatpush.msra.mxu0 %v345
        %833 = vmatpush.msra.mxu0 %v343
        %834 = vmatpush.msra.mxu0 %v341
        %835 = vmatpush.msra.mxu0 %v339
        %836 = vmatmul.f32.gmra.mxu0 %v274
        %v837 = vpop.f32.mrf.mxu0
        %v838 = vadd.f32 %v437, %v837
        %839 = vmatmul.f32.gmra.mxu0 %v276
        %v840 = vpop.f32.mrf.mxu0
        %v841 = vadd.f32 %v442, %v840
        %842 = vmatmul.f32.gmra.mxu0 %v278
        %v843 = vpop.f32.mrf.mxu0
        %v844 = vadd.f32 %v447, %v843
        %845 = vmatmul.f32.gmra.mxu0 %v280
        %v846 = vpop.f32.mrf.mxu0
        %v847 = vadd.f32 %v452, %v846
        %848 = vmatmul.f32.gmra.mxu0 %v282
        %v849 = vpop.f32.mrf.mxu0
        %v850 = vadd.f32 %v457, %v849
        %851 = vmatmul.f32.gmra.mxu0 %v284
        %v852 = vpop.f32.mrf.mxu0
        %v853 = vadd.f32 %v462, %v852
        %854 = vmatmul.f32.gmra.mxu0 %v286
        %v855 = vpop.f32.mrf.mxu0
        %v856 = vadd.f32 %v467, %v855
        %857 = vmatmul.f32.gmra.mxu0 %v288
        %v858 = vpop.f32.mrf.mxu0
        %v859 = vadd.f32 %v472, %v858
        %860 = vmatmul.f32.gmra.mxu0 %v290
        %v861 = vpop.f32.mrf.mxu0
        %v862 = vadd.f32 %v477, %v861
        %863 = vmatmul.f32.gmra.mxu0 %v292
        %v864 = vpop.f32.mrf.mxu0
        %v865 = vadd.f32 %v482, %v864
        %866 = vmatmul.f32.gmra.mxu0 %v294
        %v867 = vpop.f32.mrf.mxu0
        %v868 = vadd.f32 %v487, %v867
        %869 = vmatmul.f32.gmra.mxu0 %v296
        %v870 = vpop.f32.mrf.mxu0
        %v871 = vadd.f32 %v492, %v870
        %872 = vmatmul.f32.gmra.mxu0 %v298
        %v873 = vpop.f32.mrf.mxu0
        %v874 = vadd.f32 %v497, %v873
        %875 = vmatmul.f32.gmra.mxu0 %v300
        %v876 = vpop.f32.mrf.mxu0
        %v877 = vadd.f32 %v502, %v876
        %878 = vmatmul.f32.gmra.mxu0 %v302
        %v879 = vpop.f32.mrf.mxu0
        %v880 = vadd.f32 %v507, %v879
        %881 = vmatmul.f32.gmra.mxu0 %v304
        %v882 = vpop.f32.mrf.mxu0
        %v883 = vadd.f32 %v512, %v882
        %884 = vmatmul.f32.gmra.mxu0 %v306
        %v885 = vpop.f32.mrf.mxu0
        %v886 = vadd.f32 %v517, %v885
        %887 = vmatmul.f32.gmra.mxu0 %v308
        %v888 = vpop.f32.mrf.mxu0
        %v889 = vadd.f32 %v522, %v888
        %890 = vmatmul.f32.gmra.mxu0 %v310
        %v891 = vpop.f32.mrf.mxu0
        %v892 = vadd.f32 %v527, %v891
        %893 = vmatmul.f32.gmra.mxu0 %v312
        %v894 = vpop.f32.mrf.mxu0
        %v895 = vadd.f32 %v532, %v894
        %896 = vmatmul.f32.gmra.mxu0 %v314
        %v897 = vpop.f32.mrf.mxu0
        %v898 = vadd.f32 %v537, %v897
        %899 = vmatmul.f32.gmra.mxu0 %v316
        %v900 = vpop.f32.mrf.mxu0
        %v901 = vadd.f32 %v542, %v900
        %902 = vmatmul.f32.gmra.mxu0 %v318
        %v903 = vpop.f32.mrf.mxu0
        %v904 = vadd.f32 %v547, %v903
        %905 = vmatmul.f32.gmra.mxu0 %v320
        %v906 = vpop.f32.mrf.mxu0
        %v907 = vadd.f32 %v552, %v906
        %908 = vmatmul.f32.gmra.mxu0 %v322
        %v909 = vpop.f32.mrf.mxu0
        %v910 = vadd.f32 %v557, %v909
        %911 = vmatmul.f32.gmra.mxu0 %v324
        %v912 = vpop.f32.mrf.mxu0
        %v913 = vadd.f32 %v562, %v912
        %914 = vmatmul.f32.gmra.mxu0 %v326
        %v915 = vpop.f32.mrf.mxu0
        %v916 = vadd.f32 %v567, %v915
        %917 = vmatmul.f32.gmra.mxu0 %v328
        %v918 = vpop.f32.mrf.mxu0
        %v919 = vadd.f32 %v572, %v918
        %920 = vmatmul.f32.gmra.mxu0 %v330
        %v921 = vpop.f32.mrf.mxu0
        %v922 = vadd.f32 %v577, %v921
        %923 = vmatmul.f32.gmra.mxu0 %v332
        %v924 = vpop.f32.mrf.mxu0
        %v925 = vadd.f32 %v582, %v924
        %926 = vmatmul.f32.gmra.mxu0 %v334
        %v927 = vpop.f32.mrf.mxu0
        %v928 = vadd.f32 %v587, %v927
        %929 = vmatmul.f32.gmra.mxu0 %v336
        %v930 = vpop.f32.mrf.mxu0
        %v931 = vadd.f32 %v592, %v930
        %932 = vdwg.mxu0
        %933 = vmatpush.msra.mxu0 %v401
        %934 = vmatpush.msra.mxu0 %v399
        %935 = vmatpush.msra.mxu0 %v397
        %936 = vmatpush.msra.mxu0 %v395
        %937 = vmatpush.msra.mxu0 %v393
        %938 = vmatpush.msra.mxu0 %v391
        %939 = vmatpush.msra.mxu0 %v389
        %940 = vmatpush.msra.mxu0 %v387
        %941 = vmatpush.msra.mxu0 %v385
        %942 = vmatpush.msra.mxu0 %v383
        %943 = vmatpush.msra.mxu0 %v381
        %944 = vmatpush.msra.mxu0 %v379
        %945 = vmatpush.msra.mxu0 %v377
        %946 = vmatpush.msra.mxu0 %v375
        %947 = vmatpush.msra.mxu0 %v373
        %948 = vmatpush.msra.mxu0 %v371
        %949 = vmatmul.f32.gmra.mxu0 %v275
        %v950 = vpop.f32.mrf.mxu0
        %v951 = vadd.f32 %v838, %v950
        %952 = vmatmul.f32.gmra.mxu0 %v277
        %v953 = vpop.f32.mrf.mxu0
        %v954 = vadd.f32 %v841, %v953
        %955 = vmatmul.f32.gmra.mxu0 %v279
        %v956 = vpop.f32.mrf.mxu0
        %v957 = vadd.f32 %v844, %v956
        %958 = vmatmul.f32.gmra.mxu0 %v281
        %v959 = vpop.f32.mrf.mxu0
        %v960 = vadd.f32 %v847, %v959
        %961 = vmatmul.f32.gmra.mxu0 %v283
        %v962 = vpop.f32.mrf.mxu0
        %v963 = vadd.f32 %v850, %v962
        %964 = vmatmul.f32.gmra.mxu0 %v285
        %v965 = vpop.f32.mrf.mxu0
        %v966 = vadd.f32 %v853, %v965
        %967 = vmatmul.f32.gmra.mxu0 %v287
        %v968 = vpop.f32.mrf.mxu0
        %v969 = vadd.f32 %v856, %v968
        %970 = vmatmul.f32.gmra.mxu0 %v289
        %v971 = vpop.f32.mrf.mxu0
        %v972 = vadd.f32 %v859, %v971
        %973 = vmatmul.f32.gmra.mxu0 %v291
        %v974 = vpop.f32.mrf.mxu0
        %v975 = vadd.f32 %v862, %v974
        %976 = vmatmul.f32.gmra.mxu0 %v293
        %v977 = vpop.f32.mrf.mxu0
        %v978 = vadd.f32 %v865, %v977
        %979 = vmatmul.f32.gmra.mxu0 %v295
        %v980 = vpop.f32.mrf.mxu0
        %v981 = vadd.f32 %v868, %v980
        %982 = vmatmul.f32.gmra.mxu0 %v297
        %v983 = vpop.f32.mrf.mxu0
        %v984 = vadd.f32 %v871, %v983
        %985 = vmatmul.f32.gmra.mxu0 %v299
        %v986 = vpop.f32.mrf.mxu0
        %v987 = vadd.f32 %v874, %v986
        %988 = vmatmul.f32.gmra.mxu0 %v301
        %v989 = vpop.f32.mrf.mxu0
        %v990 = vadd.f32 %v877, %v989
        %991 = vmatmul.f32.gmra.mxu0 %v303
        %v992 = vpop.f32.mrf.mxu0
        %v993 = vadd.f32 %v880, %v992
        %994 = vmatmul.f32.gmra.mxu0 %v305
        %v995 = vpop.f32.mrf.mxu0
        %v996 = vadd.f32 %v883, %v995
        %997 = vmatmul.f32.gmra.mxu0 %v307
        %v998 = vpop.f32.mrf.mxu0
        %v999 = vadd.f32 %v886, %v998
        %1000 = vmatmul.f32.gmra.mxu0 %v309
        %v1001 = vpop.f32.mrf.mxu0
        %v1002 = vadd.f32 %v889, %v1001
        %1003 = vmatmul.f32.gmra.mxu0 %v311
        %v1004 = vpop.f32.mrf.mxu0
        %v1005 = vadd.f32 %v892, %v1004
        %1006 = vmatmul.f32.gmra.mxu0 %v313
        %v1007 = vpop.f32.mrf.mxu0
        %v1008 = vadd.f32 %v895, %v1007
        %1009 = vmatmul.f32.gmra.mxu0 %v315
        %v1010 = vpop.f32.mrf.mxu0
        %v1011 = vadd.f32 %v898, %v1010
        %1012 = vmatmul.f32.gmra.mxu0 %v317
        %v1013 = vpop.f32.mrf.mxu0
        %v1014 = vadd.f32 %v901, %v1013
        %1015 = vmatmul.f32.gmra.mxu0 %v319
        %v1016 = vpop.f32.mrf.mxu0
        %v1017 = vadd.f32 %v904, %v1016
        %1018 = vmatmul.f32.gmra.mxu0 %v321
        %v1019 = vpop.f32.mrf.mxu0
        %v1020 = vadd.f32 %v907, %v1019
        %1021 = vmatmul.f32.gmra.mxu0 %v323
        %v1022 = vpop.f32.mrf.mxu0
        %v1023 = vadd.f32 %v910, %v1022
        %1024 = vmatmul.f32.gmra.mxu0 %v325
        %v1025 = vpop.f32.mrf.mxu0
        %v1026 = vadd.f32 %v913, %v1025
        %1027 = vmatmul.f32.gmra.mxu0 %v327
        %v1028 = vpop.f32.mrf.mxu0
        %v1029 = vadd.f32 %v916, %v1028
        %1030 = vmatmul.f32.gmra.mxu0 %v329
        %v1031 = vpop.f32.mrf.mxu0
        %v1032 = vadd.f32 %v919, %v1031
        %1033 = vmatmul.f32.gmra.mxu0 %v331
        %v1034 = vpop.f32.mrf.mxu0
        %v1035 = vadd.f32 %v922, %v1034
        %1036 = vmatmul.f32.gmra.mxu0 %v333
        %v1037 = vpop.f32.mrf.mxu0
        %v1038 = vadd.f32 %v925, %v1037
        %1039 = vmatmul.f32.gmra.mxu0 %v335
        %v1040 = vpop.f32.mrf.mxu0
        %v1041 = vadd.f32 %v928, %v1040
        %1042 = vmatmul.f32.gmra.mxu0 %v337
        %v1043 = vpop.f32.mrf.mxu0
        %v1044 = vadd.f32 %v931, %v1043
        %1045 = vdwg.mxu0
        %1046 = vst [vmem:[#allocation2] sm:$0xff] %v725
        %vm1047 = vcmask 556032
        %1048 = vst.msk [vmem:[#allocation2 + $0x8] sm:$0xff] %vm1047, %v951
        %1049 = vst [vmem:[#allocation2 + $0x10] sm:$0xff] %v728
        %1050 = vst.msk [vmem:[#allocation2 + $0x18] sm:$0xff] %vm1047, %v954
        %1051 = vst [vmem:[#allocation2 + $0x20] sm:$0xff] %v731
        %1052 = vst.msk [vmem:[#allocation2 + $0x28] sm:$0xff] %vm1047, %v957
        %1053 = vst [vmem:[#allocation2 + $0x30] sm:$0xff] %v734
        %1054 = vst.msk [vmem:[#allocation2 + $0x38] sm:$0xff] %vm1047, %v960
        %1055 = vst [vmem:[#allocation2 + $0x40] sm:$0xff] %v737
        %1056 = vst.msk [vmem:[#allocation2 + $0x48] sm:$0xff] %vm1047, %v963
        %1057 = vst [vmem:[#allocation2 + $0x50] sm:$0xff] %v740
        %1058 = vst.msk [vmem:[#allocation2 + $0x58] sm:$0xff] %vm1047, %v966
        %1059 = vst [vmem:[#allocation2 + $0x60] sm:$0xff] %v743
        %1060 = vst.msk [vmem:[#allocation2 + $0x68] sm:$0xff] %vm1047, %v969
        %1061 = vst [vmem:[#allocation2 + $0x70] sm:$0xff] %v746
        %1062 = vst.msk [vmem:[#allocation2 + $0x78] sm:$0xff] %vm1047, %v972
        %1063 = vst [vmem:[#allocation2 + $0x80] sm:$0xff] %v749
        %1064 = vst.msk [vmem:[#allocation2 + $0x88] sm:$0xff] %vm1047, %v975
        %1065 = vst [vmem:[#allocation2 + $0x90] sm:$0xff] %v752
        %1066 = vst.msk [vmem:[#allocation2 + $0x98] sm:$0xff] %vm1047, %v978
        %1067 = vst [vmem:[#allocation2 + $0xa0] sm:$0xff] %v755
        %1068 = vst.msk [vmem:[#allocation2 + $0xa8] sm:$0xff] %vm1047, %v981
        %1069 = vst [vmem:[#allocation2 + $0xb0] sm:$0xff] %v758
        %1070 = vst.msk [vmem:[#allocation2 + $0xb8] sm:$0xff] %vm1047, %v984
        %1071 = vst [vmem:[#allocation2 + $0xc0] sm:$0xff] %v761
        %1072 = vst.msk [vmem:[#allocation2 + $0xc8] sm:$0xff] %vm1047, %v987
        %1073 = vst [vmem:[#allocation2 + $0xd0] sm:$0xff] %v764
        %1074 = vst.msk [vmem:[#allocation2 + $0xd8] sm:$0xff] %vm1047, %v990
        %1075 = vst [vmem:[#allocation2 + $0xe0] sm:$0xff] %v767
        %1076 = vst.msk [vmem:[#allocation2 + $0xe8] sm:$0xff] %vm1047, %v993
        %1077 = vst [vmem:[#allocation2 + $0xf0] sm:$0xff] %v770
        %1078 = vst.msk [vmem:[#allocation2 + $0xf8] sm:$0xff] %vm1047, %v996
        %1079 = vst [vmem:[#allocation2 + $0x100] sm:$0xff] %v773
        %1080 = vst.msk [vmem:[#allocation2 + $0x108] sm:$0xff] %vm1047, %v999
        %1081 = vst [vmem:[#allocation2 + $0x110] sm:$0xff] %v776
        %1082 = vst.msk [vmem:[#allocation2 + $0x118] sm:$0xff] %vm1047, %v1002
        %1083 = vst [vmem:[#allocation2 + $0x120] sm:$0xff] %v779
        %1084 = vst.msk [vmem:[#allocation2 + $0x128] sm:$0xff] %vm1047, %v1005
        %1085 = vst [vmem:[#allocation2 + $0x130] sm:$0xff] %v782
        %1086 = vst.msk [vmem:[#allocation2 + $0x138] sm:$0xff] %vm1047, %v1008
        %1087 = vst [vmem:[#allocation2 + $0x140] sm:$0xff] %v785
        %1088 = vst.msk [vmem:[#allocation2 + $0x148] sm:$0xff] %vm1047, %v1011
        %1089 = vst [vmem:[#allocation2 + $0x150] sm:$0xff] %v788
        %1090 = vst.msk [vmem:[#allocation2 + $0x158] sm:$0xff] %vm1047, %v1014
        %1091 = vst [vmem:[#allocation2 + $0x160] sm:$0xff] %v791
        %1092 = vst.msk [vmem:[#allocation2 + $0x168] sm:$0xff] %vm1047, %v1017
        %1093 = vst [vmem:[#allocation2 + $0x170] sm:$0xff] %v794
        %1094 = vst.msk [vmem:[#allocation2 + $0x178] sm:$0xff] %vm1047, %v1020
        %1095 = vst [vmem:[#allocation2 + $0x180] sm:$0xff] %v797
        %1096 = vst.msk [vmem:[#allocation2 + $0x188] sm:$0xff] %vm1047, %v1023
        %1097 = vst [vmem:[#allocation2 + $0x190] sm:$0xff] %v800
        %1098 = vst.msk [vmem:[#allocation2 + $0x198] sm:$0xff] %vm1047, %v1026
        %1099 = vst [vmem:[#allocation2 + $0x1a0] sm:$0xff] %v803
        %1100 = vst.msk [vmem:[#allocation2 + $0x1a8] sm:$0xff] %vm1047, %v1029
        %1101 = vst [vmem:[#allocation2 + $0x1b0] sm:$0xff] %v806
        %1102 = vst.msk [vmem:[#allocation2 + $0x1b8] sm:$0xff] %vm1047, %v1032
        %1103 = vst [vmem:[#allocation2 + $0x1c0] sm:$0xff] %v809
        %1104 = vst.msk [vmem:[#allocation2 + $0x1c8] sm:$0xff] %vm1047, %v1035
        %1105 = vst [vmem:[#allocation2 + $0x1d0] sm:$0xff] %v812
        %1106 = vst.msk [vmem:[#allocation2 + $0x1d8] sm:$0xff] %vm1047, %v1038
        %1107 = vst [vmem:[#allocation2 + $0x1e0] sm:$0xff] %v815
        %1108 = vst.msk [vmem:[#allocation2 + $0x1e8] sm:$0xff] %vm1047, %v1041
        %1109 = vst [vmem:[#allocation2 + $0x1f0] sm:$0xff] %v818
        %1110 = vst.msk [vmem:[#allocation2 + $0x1f8] sm:$0xff] %vm1047, %v1044
        %v1111 = vld [vmem:[%s3] sm:$0xff]
        %v1112 = vld [vmem:[%s3 + $0x8] sm:$0xff]
        %v1113 = vld [vmem:[%s3 + $0x10] sm:$0xff]
        %v1114 = vld [vmem:[%s3 + $0x18] sm:$0xff]
        %v1115 = vld [vmem:[%s3 + $0x20] sm:$0xff]
        %v1116 = vld [vmem:[%s3 + $0x28] sm:$0xff]
        %v1117 = vld [vmem:[%s3 + $0x30] sm:$0xff]
        %v1118 = vld [vmem:[%s3 + $0x38] sm:$0xff]
        %v1119 = vld [vmem:[%s3 + $0x40] sm:$0xff]
        %v1120 = vld [vmem:[%s3 + $0x48] sm:$0xff]
        %v1121 = vld [vmem:[#allocation2] sm:$0xff]
        %v1122 = vld [vmem:[#allocation2 + $0x8] sm:$0xff]
        %v1123 = vld [vmem:[#allocation2 + $0x10] sm:$0xff]
        %v1124 = vld [vmem:[#allocation2 + $0x18] sm:$0xff]
        %v1125 = vld [vmem:[#allocation2 + $0x20] sm:$0xff]
        %v1126 = vld [vmem:[#allocation2 + $0x28] sm:$0xff]
        %v1127 = vld [vmem:[#allocation2 + $0x30] sm:$0xff]
        %v1128 = vld [vmem:[#allocation2 + $0x38] sm:$0xff]
        %v1129 = vld [vmem:[#allocation2 + $0x40] sm:$0xff]
        %v1130 = vld [vmem:[#allocation2 + $0x48] sm:$0xff]
        %v1131 = vld [vmem:[#allocation2 + $0x50] sm:$0xff]
        %v1132 = vld [vmem:[#allocation2 + $0x58] sm:$0xff]
        %v1133 = vld [vmem:[#allocation2 + $0x60] sm:$0xff]
        %v1134 = vld [vmem:[#allocation2 + $0x68] sm:$0xff]
        %v1135 = vld [vmem:[#allocation2 + $0x70] sm:$0xff]
        %v1136 = vld [vmem:[#allocation2 + $0x78] sm:$0xff]
        %v1137 = vld [vmem:[#allocation2 + $0x80] sm:$0xff]
        %v1138 = vld [vmem:[#allocation2 + $0x88] sm:$0xff]
        %v1139 = vld [vmem:[#allocation2 + $0x90] sm:$0xff]
        %v1140 = vld [vmem:[#allocation2 + $0x98] sm:$0xff]
        %v1141 = vld [vmem:[#allocation2 + $0xa0] sm:$0xff]
        %v1142 = vld [vmem:[#allocation2 + $0xa8] sm:$0xff]
        %v1143 = vld [vmem:[#allocation2 + $0xb0] sm:$0xff]
        %v1144 = vld [vmem:[#allocation2 + $0xb8] sm:$0xff]
        %v1145 = vld [vmem:[#allocation2 + $0xc0] sm:$0xff]
        %v1146 = vld [vmem:[#allocation2 + $0xc8] sm:$0xff]
        %v1147 = vld [vmem:[#allocation2 + $0xd0] sm:$0xff]
        %v1148 = vld [vmem:[#allocation2 + $0xd8] sm:$0xff]
        %v1149 = vld [vmem:[#allocation2 + $0xe0] sm:$0xff]
        %v1150 = vld [vmem:[#allocation2 + $0xe8] sm:$0xff]
        %v1151 = vld [vmem:[#allocation2 + $0xf0] sm:$0xff]
        %v1152 = vld [vmem:[#allocation2 + $0xf8] sm:$0xff]
        %v1153 = vld [vmem:[#allocation2 + $0x100] sm:$0xff]
        %v1154 = vld [vmem:[#allocation2 + $0x108] sm:$0xff]
        %v1155 = vld [vmem:[#allocation2 + $0x110] sm:$0xff]
        %v1156 = vld [vmem:[#allocation2 + $0x118] sm:$0xff]
        %v1157 = vld [vmem:[#allocation2 + $0x120] sm:$0xff]
        %v1158 = vld [vmem:[#allocation2 + $0x128] sm:$0xff]
        %v1159 = vld [vmem:[#allocation2 + $0x130] sm:$0xff]
        %v1160 = vld [vmem:[#allocation2 + $0x138] sm:$0xff]
        %v1161 = vld [vmem:[#allocation2 + $0x140] sm:$0xff]
        %v1162 = vld [vmem:[#allocation2 + $0x148] sm:$0xff]
        %v1163 = vld [vmem:[#allocation2 + $0x150] sm:$0xff]
        %v1164 = vld [vmem:[#allocation2 + $0x158] sm:$0xff]
        %v1165 = vld [vmem:[#allocation2 + $0x160] sm:$0xff]
        %v1166 = vld [vmem:[#allocation2 + $0x168] sm:$0xff]
        %v1167 = vld [vmem:[#allocation2 + $0x170] sm:$0xff]
        %v1168 = vld [vmem:[#allocation2 + $0x178] sm:$0xff]
        %v1169 = vld [vmem:[#allocation2 + $0x180] sm:$0xff]
        %v1170 = vld [vmem:[#allocation2 + $0x188] sm:$0xff]
        %v1171 = vld [vmem:[#allocation2 + $0x190] sm:$0xff]
        %v1172 = vld [vmem:[#allocation2 + $0x198] sm:$0xff]
        %v1173 = vld [vmem:[#allocation2 + $0x1a0] sm:$0xff]
        %v1174 = vld [vmem:[#allocation2 + $0x1a8] sm:$0xff]
        %v1175 = vld [vmem:[#allocation2 + $0x1b0] sm:$0xff]
        %v1176 = vld [vmem:[#allocation2 + $0x1b8] sm:$0xff]
        %v1177 = vld [vmem:[#allocation2 + $0x1c0] sm:$0xff]
        %v1178 = vld [vmem:[#allocation2 + $0x1c8] sm:$0xff]
        %v1179 = vld [vmem:[#allocation2 + $0x1d0] sm:$0xff]
        %v1180 = vld [vmem:[#allocation2 + $0x1d8] sm:$0xff]
        %v1181 = vld [vmem:[#allocation2 + $0x1e0] sm:$0xff]
        %v1182 = vld [vmem:[#allocation2 + $0x1e8] sm:$0xff]
        %v1183 = vld [vmem:[#allocation2 + $0x1f0] sm:$0xff]
        %v1184 = vld [vmem:[#allocation2 + $0x1f8] sm:$0xff]
        %v1185 = vld [vmem:[%s4] sm:$0xff]
        %v1186 = vld [vmem:[%s4 + $0x8] sm:$0xff]
        %v1187 = vld [vmem:[%s4 + $0x10] sm:$0xff]
        %v1188 = vld [vmem:[%s4 + $0x18] sm:$0xff]
        %v1189 = vld [vmem:[%s4 + $0x20] sm:$0xff]
        %1191 = vset.pattern.permute.xlu0 0
        %1192 = vperm.xlu0 %1191, %v1185
        %v1193 = vpop.permute.xlu0 %1192
        %1196 = vset.pattern.permute.xlu0 0
        %1197 = vperm.xlu0 %1196, %v1186
        %v1198 = vpop.permute.xlu0 %1197
        %1201 = vset.pattern.permute.xlu0 0
        %1202 = vperm.xlu0 %1201, %v1187
        %v1203 = vpop.permute.xlu0 %1202
        %1206 = vset.pattern.permute.xlu0 0
        %1207 = vperm.xlu0 %1206, %v1188
        %v1208 = vpop.permute.xlu0 %1207
        %1211 = vset.pattern.permute.xlu0 0
        %1212 = vperm.xlu0 %1211, %v1189
        %v1213 = vpop.permute.xlu0 %1212
        %1215 = vmatpush.msra.mxu0 %v1151
        %1216 = vmatpush.msra.mxu0 %v1149
        %1217 = vmatpush.msra.mxu0 %v1147
        %1218 = vmatpush.msra.mxu0 %v1145
        %1219 = vmatpush.msra.mxu0 %v1143
        %1220 = vmatpush.msra.mxu0 %v1141
        %1221 = vmatpush.msra.mxu0 %v1139
        %1222 = vmatpush.msra.mxu0 %v1137
        %1223 = vmatpush.msra.mxu0 %v1135
        %1224 = vmatpush.msra.mxu0 %v1133
        %1225 = vmatpush.msra.mxu0 %v1131
        %1226 = vmatpush.msra.mxu0 %v1129
        %1227 = vmatpush.msra.mxu0 %v1127
        %1228 = vmatpush.msra.mxu0 %v1125
        %1229 = vmatpush.msra.mxu0 %v1123
        %1230 = vmatpush.msra.mxu0 %v1121
        %1231 = vmatmul.f32.gmra.mxu0 %v1111
        %v1232 = vpop.f32.mrf.mxu0
        %v1233 = vadd.f32 %v1193, %v1232
        %1234 = vmatmul.f32.gmra.mxu0 %v1113
        %v1235 = vpop.f32.mrf.mxu0
        %v1236 = vadd.f32 %v1198, %v1235
        %1237 = vmatmul.f32.gmra.mxu0 %v1115
        %v1238 = vpop.f32.mrf.mxu0
        %v1239 = vadd.f32 %v1203, %v1238
        %1240 = vmatmul.f32.gmra.mxu0 %v1117
        %v1241 = vpop.f32.mrf.mxu0
        %v1242 = vadd.f32 %v1208, %v1241
        %1243 = vmatmul.f32.gmra.mxu0 %v1119
        %v1244 = vpop.f32.mrf.mxu0
        %v1245 = vadd.f32 %v1213, %v1244
        %1246 = vdwg.mxu0
        %1247 = vmatpush.msra.mxu0 %v1183
        %1248 = vmatpush.msra.mxu0 %v1181
        %1249 = vmatpush.msra.mxu0 %v1179
        %1250 = vmatpush.msra.mxu0 %v1177
        %1251 = vmatpush.msra.mxu0 %v1175
        %1252 = vmatpush.msra.mxu0 %v1173
        %1253 = vmatpush.msra.mxu0 %v1171
        %1254 = vmatpush.msra.mxu0 %v1169
        %1255 = vmatpush.msra.mxu0 %v1167
        %1256 = vmatpush.msra.mxu0 %v1165
        %1257 = vmatpush.msra.mxu0 %v1163
        %1258 = vmatpush.msra.mxu0 %v1161
        %1259 = vmatpush.msra.mxu0 %v1159
        %1260 = vmatpush.msra.mxu0 %v1157
        %1261 = vmatpush.msra.mxu0 %v1155
        %1262 = vmatpush.msra.mxu0 %v1153
        %1263 = vmatmul.f32.gmra.mxu0 %v1112
        %v1264 = vpop.f32.mrf.mxu0
        %v1265 = vadd.f32 %v1233, %v1264
        %1266 = vmatmul.f32.gmra.mxu0 %v1114
        %v1267 = vpop.f32.mrf.mxu0
        %v1268 = vadd.f32 %v1236, %v1267
        %1269 = vmatmul.f32.gmra.mxu0 %v1116
        %v1270 = vpop.f32.mrf.mxu0
        %v1271 = vadd.f32 %v1239, %v1270
        %1272 = vmatmul.f32.gmra.mxu0 %v1118
        %v1273 = vpop.f32.mrf.mxu0
        %v1274 = vadd.f32 %v1242, %v1273
        %1275 = vmatmul.f32.gmra.mxu0 %v1120
        %v1276 = vpop.f32.mrf.mxu0
        %v1277 = vadd.f32 %v1245, %v1276
        %1278 = vdwg.mxu0
        %1279 = vmatpush.msra.mxu0 %v1152
        %1280 = vmatpush.msra.mxu0 %v1150
        %1281 = vmatpush.msra.mxu0 %v1148
        %1282 = vmatpush.msra.mxu0 %v1146
        %1283 = vmatpush.msra.mxu0 %v1144
        %1284 = vmatpush.msra.mxu0 %v1142
        %1285 = vmatpush.msra.mxu0 %v1140
        %1286 = vmatpush.msra.mxu0 %v1138
        %1287 = vmatpush.msra.mxu0 %v1136
        %1288 = vmatpush.msra.mxu0 %v1134
        %1289 = vmatpush.msra.mxu0 %v1132
        %1290 = vmatpush.msra.mxu0 %v1130
        %1291 = vmatpush.msra.mxu0 %v1128
        %1292 = vmatpush.msra.mxu0 %v1126
        %1293 = vmatpush.msra.mxu0 %v1124
        %1294 = vmatpush.msra.mxu0 %v1122
        %1295 = vmatmul.f32.gmra.mxu0 %v1111
        %v1296 = vpop.f32.mrf.mxu0
        %v1297 = vadd.f32 %v1193, %v1296
        %1298 = vmatmul.f32.gmra.mxu0 %v1113
        %v1299 = vpop.f32.mrf.mxu0
        %v1300 = vadd.f32 %v1198, %v1299
        %1301 = vmatmul.f32.gmra.mxu0 %v1115
        %v1302 = vpop.f32.mrf.mxu0
        %v1303 = vadd.f32 %v1203, %v1302
        %1304 = vmatmul.f32.gmra.mxu0 %v1117
        %v1305 = vpop.f32.mrf.mxu0
        %v1306 = vadd.f32 %v1208, %v1305
        %1307 = vmatmul.f32.gmra.mxu0 %v1119
        %v1308 = vpop.f32.mrf.mxu0
        %v1309 = vadd.f32 %v1213, %v1308
        %1310 = vdwg.mxu0
        %1311 = vmatpush.msra.mxu0 %v1184
        %1312 = vmatpush.msra.mxu0 %v1182
        %1313 = vmatpush.msra.mxu0 %v1180
        %1314 = vmatpush.msra.mxu0 %v1178
        %1315 = vmatpush.msra.mxu0 %v1176
        %1316 = vmatpush.msra.mxu0 %v1174
        %1317 = vmatpush.msra.mxu0 %v1172
        %1318 = vmatpush.msra.mxu0 %v1170
        %1319 = vmatpush.msra.mxu0 %v1168
        %1320 = vmatpush.msra.mxu0 %v1166
        %1321 = vmatpush.msra.mxu0 %v1164
        %1322 = vmatpush.msra.mxu0 %v1162
        %1323 = vmatpush.msra.mxu0 %v1160
        %1324 = vmatpush.msra.mxu0 %v1158
        %1325 = vmatpush.msra.mxu0 %v1156
        %1326 = vmatpush.msra.mxu0 %v1154
        %1327 = vmatmul.f32.gmra.mxu0 %v1112
        %v1328 = vpop.f32.mrf.mxu0
        %v1329 = vadd.f32 %v1297, %v1328
        %1330 = vmatmul.f32.gmra.mxu0 %v1114
        %v1331 = vpop.f32.mrf.mxu0
        %v1332 = vadd.f32 %v1300, %v1331
        %1333 = vmatmul.f32.gmra.mxu0 %v1116
        %v1334 = vpop.f32.mrf.mxu0
        %v1335 = vadd.f32 %v1303, %v1334
        %1336 = vmatmul.f32.gmra.mxu0 %v1118
        %v1337 = vpop.f32.mrf.mxu0
        %v1338 = vadd.f32 %v1306, %v1337
        %1339 = vmatmul.f32.gmra.mxu0 %v1120
        %v1340 = vpop.f32.mrf.mxu0
        %v1341 = vadd.f32 %v1309, %v1340
        %1342 = vdwg.mxu0
        %1343 = vst [vmem:[%s257] sm:$0xff] %v1265
        %1344 = vst.msk [vmem:[%s257 + $0x8] sm:$0xff] %vm1047, %v1329
        %1345 = vst [vmem:[%s257 + $0x10] sm:$0xff] %v1268
        %1346 = vst.msk [vmem:[%s257 + $0x18] sm:$0xff] %vm1047, %v1332
        %1347 = vst [vmem:[%s257 + $0x20] sm:$0xff] %v1271
        %1348 = vst.msk [vmem:[%s257 + $0x28] sm:$0xff] %vm1047, %v1335
        %1349 = vst [vmem:[%s257 + $0x30] sm:$0xff] %v1274
        %1350 = vst.msk [vmem:[%s257 + $0x38] sm:$0xff] %vm1047, %v1338
        %1351 = vst [vmem:[%s257 + $0x40] sm:$0xff] %v1277
        %1352 = vst.msk [vmem:[%s257 + $0x48] sm:$0xff] %vm1047, %v1341
        %s1353 = sand.u32 %s158, 1
        %s1354 = scalar_lea.sflag [#allocation4], %s1353
        %s1355 = sand.u32 %s158, 1
        %s1356 = smul.addr %s1355, 80
        %s1357 = scalar_lea.vmem [#allocation3], %s1356
        // Predicated region
        $region41: #{tpu_custom_call.1} parent=39 // pred_check
          %p1358 = pneg %p168
        $region42: #{tpu_custom_call.1} parent=39 // pred_check_branch
          %1360 = sbr.rel (%p1358) target = $region44
        $region43: #{tpu_custom_call.1} parent=39 // pred_region
          %s1361 = smul.u32 2, %s24
          %1363 = vsyncadd %s1354, 0
          %s1364 = smul.addr %s23, 10
          %s1365 = sadd.s32 %s1361, %s1364
          %s1366 = smul.addr %s1365, 8
          %s1367 = scalar_lea.hbm %s5, %s1366
          %s1368 = sshll.u32 %s1357, 4
          %s1369 = int_to_ptr.vmem [resolvable:$true] %s1368
          %s1370 = sshll.u32 %s1367, 4
          %s1371 = int_to_ptr.hbm [resolvable:$true] %s1370
          %1376 = dma.vmem_to_hbm [thread:$0]  %s1369, 1280, %s1371, %s1354, 256, 256, 16
        $region44: #{tpu_custom_call.1} parent=39 // pred_fallthru
          _
      $region40: #{tpu_custom_call.1} parent=5 // pred_fallthru
        _
      %p1377 = scmp.le.s32.totalorder 2, %s14
      // Predicated region
      $region45: #{tpu_custom_call.1} parent=5 // pred_check
        %p1378 = pneg %p1377
      $region46: #{tpu_custom_call.1} parent=5 // pred_check_branch
        %1380 = sbr.rel (%p1378) target = $region48
      $region47: #{tpu_custom_call.1} parent=5 // pred_region
        %s1381 = ssub.s32 %s14, 2
        // Predicated region
        $region49: #{tpu_custom_call.1} parent=47 // pred_check
          %p1382 = pneg %p174
        $region50: #{tpu_custom_call.1} parent=47 // pred_check_branch
          %1384 = sbr.rel (%p1382) target = $region52
        $region51: #{tpu_custom_call.1} parent=47 // pred_region
          %s1385 = sand.u32 %s159, 1
          %s1386 = scalar_lea.sflag [#allocation4], %s1385
          %s1387 = sand.u32 %s159, 1
          %s1388 = smul.addr %s1387, 80
          %s1389 = scalar_lea.vmem [#allocation3], %s1388
          %1391 = dma.done %s1386, 1280
        $region52: #{tpu_custom_call.1} parent=47 // pred_fallthru
          _
      $region48: #{tpu_custom_call.1} parent=5 // pred_fallthru
        _
    $region6: #{tpu_custom_call.1} parent=1 // loop_footer
      %s18 = sadd.s32 1, %s14
    $region7: #{tpu_custom_call.1} parent=1 // loop_footer_branch
      %13 = sbr.rel target = $region3
    $region8: #{tpu_custom_call.1} parent=1 // loop_exit
      _
    %1392 = vsyncpa [#allocation4], 1
    %s1393 = scalar_lea.sflag [#allocation4], 1
    %1394 = vsyncpa %s1393, 1

</llo_original>
